<compile_context>
chip_gen: v6e
topology: v6e:2x2x1
jax: 0.10.0
libtpu: 0.0.40
codegen_flags: <defaults>
</compile_context>

<pallas_src>
import jax
import jax.numpy as jnp
from jax.experimental import pallas as pl
from jax.experimental.pallas import tpu as pltpu

_LANE = 128
_BN_EPS = 1e-5


def _round_up(v, m):
    return ((v + m - 1) // m) * m


def _pick_tile(n_pad, cap):
    """Largest multiple of 128 that is <= cap and divides n_pad."""
    t = min(cap, n_pad)
    while n_pad % t:
        t -= _LANE
    return t


def _vmem_limit_bytes():
    # Per-generation scoped-VMEM limit with headroom: ~100 MiB on v5e/v6e (128 MiB
    # physical), ~56 MiB on v7x (64 MiB physical).  Fallback if query unavailable.
    try:
        phys = pltpu.get_tpu_info().vmem_capacity_bytes
        return int(min(phys - (8 << 20), 100 << 20))
    except Exception:
        return 48 << 20


_VMEM_LIMIT = _vmem_limit_bytes()


# ----------------------------------------------------------------------------- kernels

def _xw_first_kernel(h_ref, w_ref, xw_ref):
    # Layer 0: XW = X @ W (no BN / ReLU on the raw input features).
    xw_ref[...] = jnp.dot(h_ref[...], w_ref[...],
                          preferred_element_type=jnp.float32).astype(jnp.bfloat16)


def _xw_bn_kernel(h_ref, scale_ref, shift_ref, w_ref, xw_ref):
    # Previous layer's BatchNorm (folded: scale = gamma*rsqrt(var+eps),
    # shift = beta - mean*scale) + ReLU fused into this layer's prologue,
    # then XW = relu(bn(H)) @ W on the MXU.
    h = h_ref[...].astype(jnp.float32)
    h = jnp.maximum(h * scale_ref[...] + shift_ref[...], 0.0)
    xw_ref[...] = jnp.dot(h.astype(jnp.bfloat16), w_ref[...],
                          preferred_element_type=jnp.float32).astype(jnp.bfloat16)


def _agg_hidden_kernel(a_ref, xw_ref, h2_ref, sum_ref, sq_ref, acc_ref):
    # H2[row_tile] = sum_k A[row_tile, k_tile] @ XW[k_tile]   (f32 accumulator)
    # plus per-row-tile partial column sum / sum-of-squares for BatchNorm.
    k = pl.program_id(1)

    @pl.when(k == 0)
    def _():
        acc_ref[...] = jnp.zeros_like(acc_ref)

    acc_ref[...] += jnp.dot(a_ref[...], xw_ref[...],
                            preferred_element_type=jnp.float32)

    @pl.when(k == pl.num_programs(1) - 1)
    def _():
        h2 = acc_ref[...]
        h2_ref[...] = h2.astype(jnp.bfloat16)
        sum_ref[0] = jnp.sum(h2, axis=0, keepdims=True)
        sq_ref[0] = jnp.sum(h2 * h2, axis=0, keepdims=True)


def _agg_final_kernel(a_ref, xw_ref, b_ref, out_ref, acc_ref):
    k = pl.program_id(1)

    @pl.when(k == 0)
    def _():
        acc_ref[...] = jnp.zeros_like(acc_ref)

    acc_ref[...] += jnp.dot(a_ref[...], xw_ref[...],
                            preferred_element_type=jnp.float32)

    @pl.when(k == pl.num_programs(1) - 1)
    def _():
        out_ref[...] = acc_ref[...] + b_ref[...]


# ----------------------------------------------------------------------------- wrappers

def _xw_layer(h, w, scale=None, shift=None, *, row_tile):
    n_pad, cin = h.shape
    cout = w.shape[1]
    h_spec = pl.BlockSpec((row_tile, cin), lambda i: (i, 0))
    w_spec = pl.BlockSpec((cin, cout), lambda i: (0, 0))
    if scale is None:
        kernel, ops, in_specs = _xw_first_kernel, (h, w), [h_spec, w_spec]
    else:
        vec_spec = pl.BlockSpec((1, cin), lambda i: (0, 0))
        kernel = _xw_bn_kernel
        ops = (h, scale, shift, w)
        in_specs = [h_spec, vec_spec, vec_spec, w_spec]
    return pl.pallas_call(
        kernel,
        out_shape=jax.ShapeDtypeStruct((n_pad, cout), jnp.bfloat16),
        grid=(n_pad // row_tile,),
        in_specs=in_specs,
        out_specs=pl.BlockSpec((row_tile, cout), lambda i: (i, 0)),
        compiler_params=pltpu.CompilerParams(
            dimension_semantics=("parallel",),
            vmem_limit_bytes=_VMEM_LIMIT),
    )(*ops)


def _aggregate_layer(a_pad, xw, bias=None, *, row_tile, k_tile):
    n_pad = a_pad.shape[0]
    cout = xw.shape[1]
    grid = (n_pad // row_tile, n_pad // k_tile)
    a_spec = pl.BlockSpec((row_tile, k_tile), lambda i, k: (i, k))
    xw_spec = pl.BlockSpec((k_tile, cout), lambda i, k: (k, 0))
    common = dict(
        grid=grid,
        scratch_shapes=[pltpu.VMEM((row_tile, cout), jnp.float32)],
        compiler_params=pltpu.CompilerParams(
            dimension_semantics=("parallel", "arbitrary"),
            vmem_limit_bytes=_VMEM_LIMIT),
    )
    if bias is None:
        return pl.pallas_call(
            _agg_hidden_kernel,
            out_shape=(jax.ShapeDtypeStruct((n_pad, cout), jnp.bfloat16),
                       jax.ShapeDtypeStruct((grid[0], 1, cout), jnp.float32),
                       jax.ShapeDtypeStruct((grid[0], 1, cout), jnp.float32)),
            in_specs=[a_spec, xw_spec],
            out_specs=(pl.BlockSpec((row_tile, cout), lambda i, k: (i, 0)),
                       pl.BlockSpec((1, 1, cout), lambda i, k: (i, 0, 0)),
                       pl.BlockSpec((1, 1, cout), lambda i, k: (i, 0, 0))),
            **common,
        )(a_pad, xw)
    return pl.pallas_call(
        _agg_final_kernel,
        out_shape=jax.ShapeDtypeStruct((n_pad, cout), jnp.float32),
        in_specs=[a_spec, xw_spec, pl.BlockSpec((1, cout), lambda i, k: (0, 0))],
        out_specs=pl.BlockSpec((row_tile, cout), lambda i, k: (i, 0)),
        **common,
    )(a_pad, xw, bias)


@jax.jit
def model_forward(x, a_hat, params):
    """Forward pass: (num_layers-1) x [GCN conv -> BatchNorm1d (train mode) -> ReLU]
    followed by a final GCN conv.  Returns [num_nodes, out_channels] f32 logits."""
    n_real = x.shape[0]
    num_layers = len(params["w"])

    # Lane/sublane-dense node padding (zero rows/cols of A_hat are harmless).
    n_pad = _round_up(n_real, _LANE)
    row_tile = _pick_tile(n_pad, 256)
    k_tile = _pick_tile(n_pad, 512)

    a_pad = jnp.pad(a_hat, ((0, n_pad - n_real), (0, n_pad - n_real))
                    ).astype(jnp.bfloat16)

    dims = [params["w"][l].shape[0] for l in range(num_layers)]
    dims.append(params["w"][-1].shape[1])
    pads = [_round_up(d, _LANE) for d in dims]

    # Activations carried in bf16 between layers.
    h = jnp.pad(x, ((0, n_pad - n_real), (0, pads[0] - dims[0]))).astype(jnp.bfloat16)

    scale = shift = None
    out_pad = None
    for layer in range(num_layers):
        cin, cout = dims[layer], dims[layer + 1]
        cin_p, cout_p = pads[layer], pads[layer + 1]
        w = jnp.pad(params["w"][layer],
                    ((0, cin_p - cin), (0, cout_p - cout))).astype(jnp.bfloat16)

        xw = _xw_layer(h, w, scale, shift, row_tile=row_tile)

        if layer < num_layers - 1:
            # Hidden-layer conv bias is constant over the node axis and cancels
            # exactly in the following BatchNorm -> skipped.
            h2, colsum, colsq = _aggregate_layer(a_pad, xw,
                                                 row_tile=row_tile, k_tile=k_tile)
            total_sum = jnp.sum(colsum, axis=(0, 1))        # [cout_p]
            total_sq = jnp.sum(colsq, axis=(0, 1))          # [cout_p]
            mean = total_sum / n_real
            var = jnp.maximum(total_sq / n_real - mean * mean, 0.0)  # NaN guard
            gamma = jnp.pad(params["gamma"][layer], (0, cout_p - cout))
            beta = jnp.pad(params["beta"][layer], (0, cout_p - cout))
            s = gamma * jax.lax.rsqrt(var + _BN_EPS)
            scale = s.reshape(1, cout_p)
            shift = (beta - mean * s).reshape(1, cout_p)
            h = h2
        else:
            bias = jnp.pad(params["b"][layer], (0, cout_p - cout)).reshape(1, cout_p)
            out_pad = _aggregate_layer(a_pad, xw, bias,
                                       row_tile=row_tile, k_tile=k_tile)

    return out_pad[:n_real, :dims[-1]]


# ----------------------------------------------------------------------------- glue

def build_normalized_adjacency(edge_index, num_nodes):
    """Dense D^{-1/2} (A + I) D^{-1/2} from a [2, E] edge_index (plain JAX glue)."""
    src, dst = edge_index[0], edge_index[1]
    adj = jnp.zeros((num_nodes, num_nodes), jnp.float32)
    adj = adj.at[src, dst].set(1.0)
    adj = adj.at[dst, src].set(1.0)                      # make undirected
    adj = adj + jnp.eye(num_nodes, dtype=jnp.float32)    # self loops
    adj = jnp.minimum(adj, 1.0)
    deg = jnp.sum(adj, axis=1)
    d_inv_sqrt = jnp.where(deg > 0, 1.0 / jnp.sqrt(deg), 0.0)
    return adj * d_inv_sqrt[:, None] * d_inv_sqrt[None, :]


def init_params(key, in_channels, hidden_channels, out_channels, num_layers):
    """Deterministic Glorot-uniform weights, zero biases, BN gamma=1 / beta=0."""
    dims = [in_channels] + [hidden_channels] * (num_layers - 1) + [out_channels]
    params = {"w": [], "b": [], "gamma": [], "beta": []}
    for li in range(num_layers):
        key, wk = jax.random.split(key)
        c_in, c_out = dims[li], dims[li + 1]
        limit = (6.0 / (c_in + c_out)) ** 0.5
        params["w"].append(jax.random.uniform(wk, (c_in, c_out), jnp.float32,
                                              minval=-limit, maxval=limit))
        params["b"].append(jnp.zeros((c_out,), jnp.float32))
        if li < num_layers - 1:
            params["gamma"].append(jnp.ones((c_out,), jnp.float32))
            params["beta"].append(jnp.zeros((c_out,), jnp.float32))
    return params


# ----------------------------------------------------------------------------- main

if __name__ == "__main__":
    # Small, module-consistent shapes.
    num_nodes = 16
    in_channels = 8
    hidden_channels = 32
    out_channels = 4
    num_layers = 3

    key = jax.random.PRNGKey(0)
    k_x, k_e, k_p = jax.random.split(key, 3)

    # Node features [N, C_in].
    x = jax.random.normal(k_x, (num_nodes, in_channels), jnp.float32)

    # edge_index [2, E]: a ring plus a few random edges (deterministic).
    ring_src = jnp.arange(num_nodes, dtype=jnp.int32)
    ring_dst = (ring_src + 1) % num_nodes
    rand_edges = jax.random.randint(k_e, (2, 8), 0, num_nodes, dtype=jnp.int32)
    edge_index = jnp.concatenate(
        [jnp.stack([ring_src, ring_dst], axis=0), rand_edges], axis=1)

    a_hat = build_normalized_adjacency(edge_index, num_nodes)
    params = init_params(k_p, in_channels, hidden_channels, out_channels, num_layers)

    out = model_forward(x, a_hat, params)
    out = jax.block_until_ready(out)
    assert out.shape == (num_nodes, out_channels), out.shape
    assert bool(jnp.all(jnp.isfinite(out)))
    print("KERNEL_OK")
</pallas_src>

<mosaic_0001>
module attributes {stable_mosaic.version = 11 : i64} {
  func.func @_xw_first_kernel(%arg0: i32, %arg1: memref<128x128xbf16, #tpu.memory_space<vmem>>, %arg2: memref<128x128xbf16, #tpu.memory_space<vmem>>, %arg3: memref<128x128xbf16, #tpu.memory_space<vmem>>) attributes {dimension_semantics = [#tpu.dimension_semantics<parallel>], iteration_bounds = array<i64: 1>, scalar_prefetch = 0 : i64, scratch_operands = 0 : i64, tpu.core_type = #tpu.core_type<tc>, window_params = [{transform_indices = @transform_0, window_bounds = array<i64: 128, 128>}, {pipeline_mode = #tpu.pipeline_mode<synchronous>, transform_indices = @transform_1, window_bounds = array<i64: 128, 128>}, {transform_indices = @transform_2, window_bounds = array<i64: 128, 128>}]} {
    %c0 = arith.constant 0 : index
    %c0_0 = arith.constant 0 : index
    %0 = vector.load %arg1[%c0, %c0_0] : memref<128x128xbf16, #tpu.memory_space<vmem>>, vector<128x128xbf16>
    %c0_1 = arith.constant 0 : index
    %c0_2 = arith.constant 0 : index
    %1 = vector.load %arg2[%c0_1, %c0_2] : memref<128x128xbf16, #tpu.memory_space<vmem>>, vector<128x128xbf16>
    %cst = arith.constant dense<0.000000e+00> : vector<128x128xf32>
    %2 = tpu.matmul %0, %1, %cst {dimension_numbers = #tpu.dot_dimension_numbers<[1], [0], [0], [1], [0, 0, 1, 1], [], []>} : vector<128x128xbf16>, vector<128x128xbf16>, vector<128x128xf32> -> vector<128x128xf32>
    %3 = arith.truncf %2 : vector<128x128xf32> to vector<128x128xbf16>
    %c0_3 = arith.constant 0 : index
    %c0_4 = arith.constant 0 : index
    %4 = vector.load %arg3[%c0_3, %c0_4] : memref<128x128xbf16, #tpu.memory_space<vmem>>, vector<128x128xbf16>
    tpu.vector_store %arg3[%c0_3, %c0_4], %3 {strides = array<i32>} : memref<128x128xbf16, #tpu.memory_space<vmem>>, vector<128x128xbf16>,
    return
  }
  func.func @transform_0(%arg0: i32) -> (i32, i32) {
    %c0_i32 = arith.constant 0 : i32
    %c0_i32_0 = arith.constant 0 : i32
    return %arg0, %c0_i32 : i32, i32
  }
  func.func @transform_1(%arg0: i32) -> (i32, i32) {
    %c0_i32 = arith.constant 0 : i32
    %c0_i32_0 = arith.constant 0 : i32
    %c0_i32_1 = arith.constant 0 : i32
    return %c0_i32, %c0_i32_0 : i32, i32
  }
  func.func @transform_2(%arg0: i32) -> (i32, i32) {
    %c0_i32 = arith.constant 0 : i32
    %c0_i32_0 = arith.constant 0 : i32
    return %arg0, %c0_i32 : i32, i32
  }
}

module attributes {stable_mosaic.version = 11 : i64} {
  func.func @_agg_hidden_kernel(%arg0: i32, %arg1: i32, %arg2: memref<128x128xbf16, #tpu.memory_space<vmem>>, %arg3: memref<128x128xbf16, #tpu.memory_space<vmem>>, %arg4: memref<128x128xbf16, #tpu.memory_space<vmem>>, %arg5: memref<1x1x128xf32, #tpu.memory_space<vmem>>, %arg6: memref<1x1x128xf32, #tpu.memory_space<vmem>>, %arg7: memref<128x128xf32, #tpu.memory_space<vmem>>) attributes {dimension_semantics = [#tpu.dimension_semantics<parallel>, #tpu.dimension_semantics<arbitrary>], iteration_bounds = array<i64: 1, 1>, scalar_prefetch = 0 : i64, scratch_operands = 1 : i64, tpu.core_type = #tpu.core_type<tc>, window_params = [{transform_indices = @transform_0, window_bounds = array<i64: 128, 128>}, {transform_indices = @transform_1, window_bounds = array<i64: 128, 128>}, {transform_indices = @transform_2, window_bounds = array<i64: 128, 128>}, {transform_indices = @transform_3, window_bounds = array<i64: 1, 1, 128>}, {transform_indices = @transform_4, window_bounds = array<i64: 1, 1, 128>}]} {
    %c0_i32 = arith.constant 0 : i32
    %0 = arith.cmpi eq, %arg1, %c0_i32 : i32
    %1 = arith.extui %0 : i1 to i32
    %c0_i32_0 = arith.constant 0 : i32
    %2 = arith.cmpi ne, %1, %c0_i32_0 : i32
    scf.if %2 {
      %cst_10 = arith.constant 0.000000e+00 : f32
      %12 = vector.broadcast %cst_10 : f32 to vector<128x128xf32>
      %c0_11 = arith.constant 0 : index
      %c0_12 = arith.constant 0 : index
      %13 = vector.load %arg7[%c0_11, %c0_12] : memref<128x128xf32, #tpu.memory_space<vmem>>, vector<128x128xf32>
      tpu.vector_store %arg7[%c0_11, %c0_12], %12 {strides = array<i32>} : memref<128x128xf32, #tpu.memory_space<vmem>>, vector<128x128xf32>,
    } else {
    }
    %c0 = arith.constant 0 : index
    %c0_1 = arith.constant 0 : index
    %3 = vector.load %arg7[%c0, %c0_1] : memref<128x128xf32, #tpu.memory_space<vmem>>, vector<128x128xf32>
    %c0_2 = arith.constant 0 : index
    %c0_3 = arith.constant 0 : index
    %4 = vector.load %arg2[%c0_2, %c0_3] : memref<128x128xbf16, #tpu.memory_space<vmem>>, vector<128x128xbf16>
    %c0_4 = arith.constant 0 : index
    %c0_5 = arith.constant 0 : index
    %5 = vector.load %arg3[%c0_4, %c0_5] : memref<128x128xbf16, #tpu.memory_space<vmem>>, vector<128x128xbf16>
    %cst = arith.constant dense<0.000000e+00> : vector<128x128xf32>
    %6 = tpu.matmul %4, %5, %cst {dimension_numbers = #tpu.dot_dimension_numbers<[1], [0], [0], [1], [0, 0, 1, 1], [], []>} : vector<128x128xbf16>, vector<128x128xbf16>, vector<128x128xf32> -> vector<128x128xf32>
    %7 = arith.addf %3, %6 : vector<128x128xf32>
    %c0_6 = arith.constant 0 : index
    %c0_7 = arith.constant 0 : index
    %8 = vector.load %arg7[%c0_6, %c0_7] : memref<128x128xf32, #tpu.memory_space<vmem>>, vector<128x128xf32>
    tpu.vector_store %arg7[%c0_6, %c0_7], %7 {strides = array<i32>} : memref<128x128xf32, #tpu.memory_space<vmem>>, vector<128x128xf32>,
    %c0_i32_8 = arith.constant 0 : i32
    %9 = arith.cmpi eq, %arg1, %c0_i32_8 : i32
    %10 = arith.extui %9 : i1 to i32
    %c0_i32_9 = arith.constant 0 : i32
    %11 = arith.cmpi ne, %10, %c0_i32_9 : i32
    scf.if %11 {
      %c0_10 = arith.constant 0 : index
      %c0_11 = arith.constant 0 : index
      %12 = vector.load %arg7[%c0_10, %c0_11] : memref<128x128xf32, #tpu.memory_space<vmem>>, vector<128x128xf32>
      %13 = arith.truncf %12 : vector<128x128xf32> to vector<128x128xbf16>
      %c0_12 = arith.constant 0 : index
      %c0_13 = arith.constant 0 : index
      %14 = vector.load %arg4[%c0_12, %c0_13] : memref<128x128xbf16, #tpu.memory_space<vmem>>, vector<128x128xbf16>
      tpu.vector_store %arg4[%c0_12, %c0_13], %13 {strides = array<i32>} : memref<128x128xbf16, #tpu.memory_space<vmem>>, vector<128x128xbf16>,
      %cst_14 = arith.constant dense<0.000000e+00> : vector<128xf32>
      %15 = vector.multi_reduction <add>, %12, %cst_14 [0] : vector<128x128xf32> to vector<128xf32>
      %16 = vector.shape_cast %15 : vector<128xf32> to vector<1x128xf32>
      %c0_15 = arith.constant 0 : index
      %c0_16 = arith.constant 0 : index
      %c0_17 = arith.constant 0 : index
      %17 = vector.load %arg5[%c0_15, %c0_16, %c0_17] : memref<1x1x128xf32, #tpu.memory_space<vmem>>, vector<1x1x128xf32>
      %18 = vector.shape_cast %17 : vector<1x1x128xf32> to vector<1x128xf32>
      %19 = vector.shape_cast %16 : vector<1x128xf32> to vector<1x1x128xf32>
      tpu.vector_store %arg5[%c0_15, %c0_16, %c0_17], %19 {strides = array<i32>} : memref<1x1x128xf32, #tpu.memory_space<vmem>>, vector<1x1x128xf32>,
      %20 = arith.mulf %12, %12 : vector<128x128xf32>
      %cst_18 = arith.constant dense<0.000000e+00> : vector<128xf32>
      %21 = vector.multi_reduction <add>, %20, %cst_18 [0] : vector<128x128xf32> to vector<128xf32>
      %22 = vector.shape_cast %21 : vector<128xf32> to vector<1x128xf32>
      %c0_19 = arith.constant 0 : index
      %c0_20 = arith.constant 0 : index
      %c0_21 = arith.constant 0 : index
      %23 = vector.load %arg6[%c0_19, %c0_20, %c0_21] : memref<1x1x128xf32, #tpu.memory_space<vmem>>, vector<1x1x128xf32>
      %24 = vector.shape_cast %23 : vector<1x1x128xf32> to vector<1x128xf32>
      %25 = vector.shape_cast %22 : vector<1x128xf32> to vector<1x1x128xf32>
      tpu.vector_store %arg6[%c0_19, %c0_20, %c0_21], %25 {strides = array<i32>} : memref<1x1x128xf32, #tpu.memory_space<vmem>>, vector<1x1x128xf32>,
    } else {
    }
    return
  }
  func.func @transform_0(%arg0: i32, %arg1: i32) -> (i32, i32) {
    %c0_i32 = arith.constant 0 : i32
    return %arg0, %arg1 : i32, i32
  }
  func.func @transform_1(%arg0: i32, %arg1: i32) -> (i32, i32) {
    %c0_i32 = arith.constant 0 : i32
    %c0_i32_0 = arith.constant 0 : i32
    return %arg1, %c0_i32 : i32, i32
  }
  func.func @transform_2(%arg0: i32, %arg1: i32) -> (i32, i32) {
    %c0_i32 = arith.constant 0 : i32
    %c0_i32_0 = arith.constant 0 : i32
    return %arg0, %c0_i32 : i32, i32
  }
  func.func @transform_3(%arg0: i32, %arg1: i32) -> (i32, i32, i32) {
    %c0_i32 = arith.constant 0 : i32
    %c0_i32_0 = arith.constant 0 : i32
    %c0_i32_1 = arith.constant 0 : i32
    return %arg0, %c0_i32, %c0_i32_0 : i32, i32, i32
  }
  func.func @transform_4(%arg0: i32, %arg1: i32) -> (i32, i32, i32) {
    %c0_i32 = arith.constant 0 : i32
    %c0_i32_0 = arith.constant 0 : i32
    %c0_i32_1 = arith.constant 0 : i32
    return %arg0, %c0_i32, %c0_i32_0 : i32, i32, i32
  }
}

module attributes {stable_mosaic.version = 11 : i64} {
  func.func @_xw_bn_kernel(%arg0: i32, %arg1: memref<128x128xbf16, #tpu.memory_space<vmem>>, %arg2: memref<1x128xf32, #tpu.memory_space<vmem>>, %arg3: memref<1x128xf32, #tpu.memory_space<vmem>>, %arg4: memref<128x128xbf16, #tpu.memory_space<vmem>>, %arg5: memref<128x128xbf16, #tpu.memory_space<vmem>>) attributes {dimension_semantics = [#tpu.dimension_semantics<parallel>], iteration_bounds = array<i64: 1>, scalar_prefetch = 0 : i64, scratch_operands = 0 : i64, tpu.core_type = #tpu.core_type<tc>, window_params = [{transform_indices = @transform_0, window_bounds = array<i64: 128, 128>}, {pipeline_mode = #tpu.pipeline_mode<synchronous>, transform_indices = @transform_1, window_bounds = array<i64: 1, 128>}, {pipeline_mode = #tpu.pipeline_mode<synchronous>, transform_indices = @transform_2, window_bounds = array<i64: 1, 128>}, {pipeline_mode = #tpu.pipeline_mode<synchronous>, transform_indices = @transform_3, window_bounds = array<i64: 128, 128>}, {transform_indices = @transform_4, window_bounds = array<i64: 128, 128>}]} {
    %c0 = arith.constant 0 : index
    %c0_0 = arith.constant 0 : index
    %0 = vector.load %arg1[%c0, %c0_0] : memref<128x128xbf16, #tpu.memory_space<vmem>>, vector<128x128xbf16>
    %1 = arith.extf %0 : vector<128x128xbf16> to vector<128x128xf32>
    %c0_1 = arith.constant 0 : index
    %c0_2 = arith.constant 0 : index
    %2 = vector.load %arg2[%c0_1, %c0_2] : memref<1x128xf32, #tpu.memory_space<vmem>>, vector<1x128xf32>
    %3 = vector.broadcast %2 : vector<1x128xf32> to vector<128x128xf32>
    %4 = arith.mulf %1, %3 : vector<128x128xf32>
    %c0_3 = arith.constant 0 : index
    %c0_4 = arith.constant 0 : index
    %5 = vector.load %arg3[%c0_3, %c0_4] : memref<1x128xf32, #tpu.memory_space<vmem>>, vector<1x128xf32>
    %6 = vector.broadcast %5 : vector<1x128xf32> to vector<128x128xf32>
    %7 = arith.addf %4, %6 : vector<128x128xf32>
    %cst = arith.constant 0.000000e+00 : f32
    %8 = vector.broadcast %cst : f32 to vector<128x128xf32>
    %9 = arith.maximumf %7, %8 : vector<128x128xf32>
    %10 = arith.truncf %9 : vector<128x128xf32> to vector<128x128xbf16>
    %c0_5 = arith.constant 0 : index
    %c0_6 = arith.constant 0 : index
    %11 = vector.load %arg4[%c0_5, %c0_6] : memref<128x128xbf16, #tpu.memory_space<vmem>>, vector<128x128xbf16>
    %cst_7 = arith.constant dense<0.000000e+00> : vector<128x128xf32>
    %12 = tpu.matmul %10, %11, %cst_7 {dimension_numbers = #tpu.dot_dimension_numbers<[1], [0], [0], [1], [0, 0, 1, 1], [], []>} : vector<128x128xbf16>, vector<128x128xbf16>, vector<128x128xf32> -> vector<128x128xf32>
    %13 = arith.truncf %12 : vector<128x128xf32> to vector<128x128xbf16>
    %c0_8 = arith.constant 0 : index
    %c0_9 = arith.constant 0 : index
    %14 = vector.load %arg5[%c0_8, %c0_9] : memref<128x128xbf16, #tpu.memory_space<vmem>>, vector<128x128xbf16>
    tpu.vector_store %arg5[%c0_8, %c0_9], %13 {strides = array<i32>} : memref<128x128xbf16, #tpu.memory_space<vmem>>, vector<128x128xbf16>,
    return
  }
  func.func @transform_0(%arg0: i32) -> (i32, i32) {
    %c0_i32 = arith.constant 0 : i32
    %c0_i32_0 = arith.constant 0 : i32
    return %arg0, %c0_i32 : i32, i32
  }
  func.func @transform_1(%arg0: i32) -> (i32, i32) {
    %c0_i32 = arith.constant 0 : i32
    %c0_i32_0 = arith.constant 0 : i32
    %c0_i32_1 = arith.constant 0 : i32
    return %c0_i32, %c0_i32_0 : i32, i32
  }
  func.func @transform_2(%arg0: i32) -> (i32, i32) {
    %c0_i32 = arith.constant 0 : i32
    %c0_i32_0 = arith.constant 0 : i32
    %c0_i32_1 = arith.constant 0 : i32
    return %c0_i32, %c0_i32_0 : i32, i32
  }
  func.func @transform_3(%arg0: i32) -> (i32, i32) {
    %c0_i32 = arith.constant 0 : i32
    %c0_i32_0 = arith.constant 0 : i32
    %c0_i32_1 = arith.constant 0 : i32
    return %c0_i32, %c0_i32_0 : i32, i32
  }
  func.func @transform_4(%arg0: i32) -> (i32, i32) {
    %c0_i32 = arith.constant 0 : i32
    %c0_i32_0 = arith.constant 0 : i32
    return %arg0, %c0_i32 : i32, i32
  }
}

module attributes {stable_mosaic.version = 11 : i64} {
  func.func @_agg_final_kernel(%arg0: i32, %arg1: i32, %arg2: memref<128x128xbf16, #tpu.memory_space<vmem>>, %arg3: memref<128x128xbf16, #tpu.memory_space<vmem>>, %arg4: memref<1x128xf32, #tpu.memory_space<vmem>>, %arg5: memref<128x128xf32, #tpu.memory_space<vmem>>, %arg6: memref<128x128xf32, #tpu.memory_space<vmem>>) attributes {dimension_semantics = [#tpu.dimension_semantics<parallel>, #tpu.dimension_semantics<arbitrary>], iteration_bounds = array<i64: 1, 1>, scalar_prefetch = 0 : i64, scratch_operands = 1 : i64, tpu.core_type = #tpu.core_type<tc>, window_params = [{transform_indices = @transform_0, window_bounds = array<i64: 128, 128>}, {transform_indices = @transform_1, window_bounds = array<i64: 128, 128>}, {pipeline_mode = #tpu.pipeline_mode<synchronous>, transform_indices = @transform_2, window_bounds = array<i64: 1, 128>}, {transform_indices = @transform_3, window_bounds = array<i64: 128, 128>}]} {
    %c0_i32 = arith.constant 0 : i32
    %0 = arith.cmpi eq, %arg1, %c0_i32 : i32
    %1 = arith.extui %0 : i1 to i32
    %c0_i32_0 = arith.constant 0 : i32
    %2 = arith.cmpi ne, %1, %c0_i32_0 : i32
    scf.if %2 {
      %cst_10 = arith.constant 0.000000e+00 : f32
      %12 = vector.broadcast %cst_10 : f32 to vector<128x128xf32>
      %c0_11 = arith.constant 0 : index
      %c0_12 = arith.constant 0 : index
      %13 = vector.load %arg6[%c0_11, %c0_12] : memref<128x128xf32, #tpu.memory_space<vmem>>, vector<128x128xf32>
      tpu.vector_store %arg6[%c0_11, %c0_12], %12 {strides = array<i32>} : memref<128x128xf32, #tpu.memory_space<vmem>>, vector<128x128xf32>,
    } else {
    }
    %c0 = arith.constant 0 : index
    %c0_1 = arith.constant 0 : index
    %3 = vector.load %arg6[%c0, %c0_1] : memref<128x128xf32, #tpu.memory_space<vmem>>, vector<128x128xf32>
    %c0_2 = arith.constant 0 : index
    %c0_3 = arith.constant 0 : index
    %4 = vector.load %arg2[%c0_2, %c0_3] : memref<128x128xbf16, #tpu.memory_space<vmem>>, vector<128x128xbf16>
    %c0_4 = arith.constant 0 : index
    %c0_5 = arith.constant 0 : index
    %5 = vector.load %arg3[%c0_4, %c0_5] : memref<128x128xbf16, #tpu.memory_space<vmem>>, vector<128x128xbf16>
    %cst = arith.constant dense<0.000000e+00> : vector<128x128xf32>
    %6 = tpu.matmul %4, %5, %cst {dimension_numbers = #tpu.dot_dimension_numbers<[1], [0], [0], [1], [0, 0, 1, 1], [], []>} : vector<128x128xbf16>, vector<128x128xbf16>, vector<128x128xf32> -> vector<128x128xf32>
    %7 = arith.addf %3, %6 : vector<128x128xf32>
    %c0_6 = arith.constant 0 : index
    %c0_7 = arith.constant 0 : index
    %8 = vector.load %arg6[%c0_6, %c0_7] : memref<128x128xf32, #tpu.memory_space<vmem>>, vector<128x128xf32>
    tpu.vector_store %arg6[%c0_6, %c0_7], %7 {strides = array<i32>} : memref<128x128xf32, #tpu.memory_space<vmem>>, vector<128x128xf32>,
    %c0_i32_8 = arith.constant 0 : i32
    %9 = arith.cmpi eq, %arg1, %c0_i32_8 : i32
    %10 = arith.extui %9 : i1 to i32
    %c0_i32_9 = arith.constant 0 : i32
    %11 = arith.cmpi ne, %10, %c0_i32_9 : i32
    scf.if %11 {
      %c0_10 = arith.constant 0 : index
      %c0_11 = arith.constant 0 : index
      %12 = vector.load %arg6[%c0_10, %c0_11] : memref<128x128xf32, #tpu.memory_space<vmem>>, vector<128x128xf32>
      %c0_12 = arith.constant 0 : index
      %c0_13 = arith.constant 0 : index
      %13 = vector.load %arg4[%c0_12, %c0_13] : memref<1x128xf32, #tpu.memory_space<vmem>>, vector<1x128xf32>
      %14 = vector.broadcast %13 : vector<1x128xf32> to vector<128x128xf32>
      %15 = arith.addf %12, %14 : vector<128x128xf32>
      %c0_14 = arith.constant 0 : index
      %c0_15 = arith.constant 0 : index
      %16 = vector.load %arg5[%c0_14, %c0_15] : memref<128x128xf32, #tpu.memory_space<vmem>>, vector<128x128xf32>
      tpu.vector_store %arg5[%c0_14, %c0_15], %15 {strides = array<i32>} : memref<128x128xf32, #tpu.memory_space<vmem>>, vector<128x128xf32>,
    } else {
    }
    return
  }
  func.func @transform_0(%arg0: i32, %arg1: i32) -> (i32, i32) {
    %c0_i32 = arith.constant 0 : i32
    return %arg0, %arg1 : i32, i32
  }
  func.func @transform_1(%arg0: i32, %arg1: i32) -> (i32, i32) {
    %c0_i32 = arith.constant 0 : i32
    %c0_i32_0 = arith.constant 0 : i32
    return %arg1, %c0_i32 : i32, i32
  }
  func.func @transform_2(%arg0: i32, %arg1: i32) -> (i32, i32) {
    %c0_i32 = arith.constant 0 : i32
    %c0_i32_0 = arith.constant 0 : i32
    %c0_i32_1 = arith.constant 0 : i32
    return %c0_i32, %c0_i32_0 : i32, i32
  }
  func.func @transform_3(%arg0: i32, %arg1: i32) -> (i32, i32) {
    %c0_i32 = arith.constant 0 : i32
    %c0_i32_0 = arith.constant 0 : i32
    return %arg0, %c0_i32 : i32, i32
  }
}

</mosaic_0001>

<llo_original>
// kernel: model_forward.6
$region0: #{model_forward.6}
  #allocation0 [shape = 'u32[]', space=smem, size = 0x4, offset = 0x4, fixed_abs, tag = 'smem constant byte address 0x4 - core index']
  #allocation1 [shape = 'u32[144,128]{1,0:T(1,128)}', space=vmem, size = 0x12000, scoped, tag = 'internal scratch']
  %s0 = inlined_call_operand.vmem [shape: bf16[128,128], index: 0, kind: input, shape index: {}]
  %s1 = inlined_call_operand.vmem [shape: bf16[128,128], index: 1, kind: input, shape index: {}]
  %s2 = inlined_call_operand.vmem [shape: bf16[128,128], index: 2, kind: output, shape index: {}]
  %s3 = sld [smem:[#allocation0]]
  $region18: #{model_forward.6} parent=0
    _
  %s5 = ssub.s32 1, %s3
  %s6 = scalar_select 0, %s5, %s3
  // Predicated region
  $region2: #{model_forward.6} parent=0 // pred_check
    _
  $region3: #{model_forward.6} parent=0 // pred_check_branch
    %8 = sbr.rel (0) target = $region5
  $region4: #{model_forward.6} parent=0 // pred_region
    _
  $region5: #{model_forward.6} parent=0 // pred_fallthru
    _
  // Predicated region
  $region6: #{model_forward.6} parent=0 // pred_check
    _
  $region7: #{model_forward.6} parent=0 // pred_check_branch
    %10 = sbr.rel (0) target = $region9
  $region8: #{model_forward.6} parent=0 // pred_region
    _
  $region9: #{model_forward.6} parent=0 // pred_fallthru
    _
  %v12 = vld [vmem:[%s0] sm:$0xf]
  %v13 = vld [vmem:[%s0 + $0x4] sm:$0xf]
  %v14 = vld [vmem:[%s0 + $0x8] sm:$0xf]
  %v15 = vld [vmem:[%s0 + $0xc] sm:$0xf]
  %v16 = vld [vmem:[%s0 + $0x10] sm:$0xf]
  %v17 = vld [vmem:[%s0 + $0x14] sm:$0xf]
  %v18 = vld [vmem:[%s0 + $0x18] sm:$0xf]
  %v19 = vld [vmem:[%s0 + $0x1c] sm:$0xf]
  %v20 = vld [vmem:[%s0 + $0x20] sm:$0xf]
  %v21 = vld [vmem:[%s0 + $0x24] sm:$0xf]
  %v22 = vld [vmem:[%s0 + $0x28] sm:$0xf]
  %v23 = vld [vmem:[%s0 + $0x2c] sm:$0xf]
  %v24 = vld [vmem:[%s0 + $0x30] sm:$0xf]
  %v25 = vld [vmem:[%s0 + $0x34] sm:$0xf]
  %v26 = vld [vmem:[%s0 + $0x38] sm:$0xf]
  %v27 = vld [vmem:[%s0 + $0x3c] sm:$0xf]
  %v28 = vld [vmem:[%s1] sm:$0xf]
  %v29 = vld [vmem:[%s1 + $0x4] sm:$0xf]
  %v30 = vld [vmem:[%s1 + $0x8] sm:$0xf]
  %v31 = vld [vmem:[%s1 + $0xc] sm:$0xf]
  %v32 = vld [vmem:[%s1 + $0x10] sm:$0xf]
  %v33 = vld [vmem:[%s1 + $0x14] sm:$0xf]
  %v34 = vld [vmem:[%s1 + $0x18] sm:$0xf]
  %v35 = vld [vmem:[%s1 + $0x1c] sm:$0xf]
  %v36 = vld [vmem:[%s1 + $0x20] sm:$0xf]
  %v37 = vld [vmem:[%s1 + $0x24] sm:$0xf]
  %v38 = vld [vmem:[%s1 + $0x28] sm:$0xf]
  %v39 = vld [vmem:[%s1 + $0x2c] sm:$0xf]
  %v40 = vld [vmem:[%s1 + $0x30] sm:$0xf]
  %v41 = vld [vmem:[%s1 + $0x34] sm:$0xf]
  %v42 = vld [vmem:[%s1 + $0x38] sm:$0xf]
  %v43 = vld [vmem:[%s1 + $0x3c] sm:$0xf]
  %v60 = vunpack.c.l.b16 %v12
  %v61 = vunpack.c.l.b16 %v13
  %v62 = vunpack.c.l.b16 %v14
  %v63 = vunpack.c.l.b16 %v15
  %v64 = vunpack.c.l.b16 %v16
  %v65 = vunpack.c.l.b16 %v17
  %v66 = vunpack.c.l.b16 %v18
  %v67 = vunpack.c.l.b16 %v19
  %v68 = vunpack.c.l.b16 %v20
  %v69 = vunpack.c.l.b16 %v21
  %v70 = vunpack.c.l.b16 %v22
  %v71 = vunpack.c.l.b16 %v23
  %v72 = vunpack.c.l.b16 %v24
  %v73 = vunpack.c.l.b16 %v25
  %v74 = vunpack.c.l.b16 %v26
  %v75 = vunpack.c.l.b16 %v27
  %v76 = vpack.c.b16 %v61, %v60
  %v77 = vpack.c.b16 %v63, %v62
  %v78 = vpack.c.b16 %v65, %v64
  %v79 = vpack.c.b16 %v67, %v66
  %v80 = vpack.c.b16 %v69, %v68
  %v81 = vpack.c.b16 %v71, %v70
  %v82 = vpack.c.b16 %v73, %v72
  %v83 = vpack.c.b16 %v75, %v74
  %v108 = vunpack.c.l.b16 %v28
  %v109 = vunpack.c.l.b16 %v29
  %v110 = vunpack.c.l.b16 %v30
  %v111 = vunpack.c.l.b16 %v31
  %v112 = vunpack.c.l.b16 %v32
  %v113 = vunpack.c.l.b16 %v33
  %v114 = vunpack.c.l.b16 %v34
  %v115 = vunpack.c.l.b16 %v35
  %v116 = vunpack.c.l.b16 %v36
  %v117 = vunpack.c.l.b16 %v37
  %v118 = vunpack.c.l.b16 %v38
  %v119 = vunpack.c.l.b16 %v39
  %v120 = vunpack.c.l.b16 %v40
  %v121 = vunpack.c.l.b16 %v41
  %v122 = vunpack.c.l.b16 %v42
  %v123 = vunpack.c.l.b16 %v43
  %v124 = vpack.c.b16 %v109, %v108
  %v125 = vpack.c.b16 %v111, %v110
  %v126 = vpack.c.b16 %v113, %v112
  %v127 = vpack.c.b16 %v115, %v114
  %v128 = vpack.c.b16 %v117, %v116
  %v129 = vpack.c.b16 %v119, %v118
  %v130 = vpack.c.b16 %v121, %v120
  %v131 = vpack.c.b16 %v123, %v122
  %140 = vmatprep.subr.bf16.mxu0 0
  %141 = vmatpush1.bf16.msra.mxu0 %v131
  %142 = vmatprep.subr.bf16.mxu0 0
  %143 = vmatpush1.bf16.msra.mxu0 %v130
  %144 = vmatprep.subr.bf16.mxu0 0
  %145 = vmatpush1.bf16.msra.mxu0 %v129
  %146 = vmatprep.subr.bf16.mxu0 0
  %147 = vmatpush1.bf16.msra.mxu0 %v128
  %148 = vmatprep.subr.bf16.mxu0 0
  %149 = vmatpush1.bf16.msra.mxu0 %v127
  %150 = vmatprep.subr.bf16.mxu0 0
  %151 = vmatpush1.bf16.msra.mxu0 %v126
  %152 = vmatprep.subr.bf16.mxu0 0
  %153 = vmatpush1.bf16.msra.mxu0 %v125
  %154 = vmatprep.subr.bf16.mxu0 0
  %155 = vmatpush1.bf16.msra.mxu0 %v124
  %156 = vmatprep.subr.bf16.mxu0 0
  %157 = vmatpush2.bf16.msra.mxu0 0
  %158 = vmatprep.subr.bf16.mxu0 0
  %159 = vmatpush2.bf16.msra.mxu0 0
  %160 = vmatprep.subr.bf16.mxu0 0
  %161 = vmatpush2.bf16.msra.mxu0 0
  %162 = vmatprep.subr.bf16.mxu0 0
  %163 = vmatpush2.bf16.msra.mxu0 0
  %164 = vmatprep.subr.bf16.mxu0 0
  %165 = vmatpush2.bf16.msra.mxu0 0
  %166 = vmatprep.subr.bf16.mxu0 0
  %167 = vmatpush2.bf16.msra.mxu0 0
  %168 = vmatprep.subr.bf16.mxu0 0
  %169 = vmatpush2.bf16.msra.mxu0 0
  %170 = vmatprep.subr.bf16.mxu0 0
  %171 = vmatpush2.bf16.msra.mxu0 0
  %172 = vmatprep.mubr.bf16.mxu0 0
  %173 = vmatmul.mubr.bf16.gmra.mxu0 %v76
  %v174 = vpop.f32.mrf.mxu0
  %v175 = vadd.f32 0.0, %v174
  %v176 = vpop.f32.mrf.mxu0
  %v177 = vpop.f32.mrf.mxu0
  %v178 = vadd.f32 0.0, %v177
  %v179 = vpop.f32.mrf.mxu0
  %180 = vmatprep.mubr.bf16.mxu0 0
  %181 = vmatmul.mubr.bf16.gmra.mxu0 %v77
  %v182 = vpop.f32.mrf.mxu0
  %v183 = vadd.f32 0.0, %v182
  %v184 = vpop.f32.mrf.mxu0
  %v185 = vpop.f32.mrf.mxu0
  %v186 = vadd.f32 0.0, %v185
  %v187 = vpop.f32.mrf.mxu0
  %188 = vmatprep.mubr.bf16.mxu0 0
  %189 = vmatmul.mubr.bf16.gmra.mxu0 %v78
  %v190 = vpop.f32.mrf.mxu0
  %v191 = vadd.f32 0.0, %v190
  %v192 = vpop.f32.mrf.mxu0
  %v193 = vpop.f32.mrf.mxu0
  %v194 = vadd.f32 0.0, %v193
  %v195 = vpop.f32.mrf.mxu0
  %196 = vmatprep.mubr.bf16.mxu0 0
  %197 = vmatmul.mubr.bf16.gmra.mxu0 %v79
  %v198 = vpop.f32.mrf.mxu0
  %v199 = vadd.f32 0.0, %v198
  %v200 = vpop.f32.mrf.mxu0
  %v201 = vpop.f32.mrf.mxu0
  %v202 = vadd.f32 0.0, %v201
  %v203 = vpop.f32.mrf.mxu0
  %204 = vmatprep.mubr.bf16.mxu0 0
  %205 = vmatmul.mubr.bf16.gmra.mxu0 %v80
  %v206 = vpop.f32.mrf.mxu0
  %v207 = vadd.f32 0.0, %v206
  %v208 = vpop.f32.mrf.mxu0
  %v209 = vpop.f32.mrf.mxu0
  %v210 = vadd.f32 0.0, %v209
  %v211 = vpop.f32.mrf.mxu0
  %212 = vmatprep.mubr.bf16.mxu0 0
  %213 = vmatmul.mubr.bf16.gmra.mxu0 %v81
  %v214 = vpop.f32.mrf.mxu0
  %v215 = vadd.f32 0.0, %v214
  %v216 = vpop.f32.mrf.mxu0
  %v217 = vpop.f32.mrf.mxu0
  %v218 = vadd.f32 0.0, %v217
  %v219 = vpop.f32.mrf.mxu0
  %220 = vmatprep.mubr.bf16.mxu0 0
  %221 = vmatmul.mubr.bf16.gmra.mxu0 %v82
  %v222 = vpop.f32.mrf.mxu0
  %v223 = vadd.f32 0.0, %v222
  %v224 = vpop.f32.mrf.mxu0
  %v225 = vpop.f32.mrf.mxu0
  %v226 = vadd.f32 0.0, %v225
  %v227 = vpop.f32.mrf.mxu0
  %228 = vmatprep.mubr.bf16.mxu0 0
  %229 = vmatmul.mubr.bf16.gmra.mxu0 %v83
  %v230 = vpop.f32.mrf.mxu0
  %v231 = vadd.f32 0.0, %v230
  %v232 = vpop.f32.mrf.mxu0
  %v233 = vpop.f32.mrf.mxu0
  %v234 = vadd.f32 0.0, %v233
  %v235 = vpop.f32.mrf.mxu0
  %236 = vdwg.mxu0
  %v237 = vpack.c.bf16 %v178, %v175
  %v238 = vpack.c.bf16 %v186, %v183
  %v239 = vpack.c.bf16 %v194, %v191
  %v240 = vpack.c.bf16 %v202, %v199
  %v241 = vpack.c.bf16 %v210, %v207
  %v242 = vpack.c.bf16 %v218, %v215
  %v243 = vpack.c.bf16 %v226, %v223
  %v244 = vpack.c.bf16 %v234, %v231
  %v253 = vunpack.c.l.b16 %v237
  %v254 = vunpack.c.h.b16 %v237
  %v255 = vunpack.c.l.b16 %v238
  %v256 = vunpack.c.h.b16 %v238
  %v257 = vunpack.c.l.b16 %v239
  %v258 = vunpack.c.h.b16 %v239
  %v259 = vunpack.c.l.b16 %v240
  %v260 = vunpack.c.h.b16 %v240
  %v261 = vunpack.c.l.b16 %v241
  %v262 = vunpack.c.h.b16 %v241
  %v263 = vunpack.c.l.b16 %v242
  %v264 = vunpack.c.h.b16 %v242
  %v265 = vunpack.c.l.b16 %v243
  %v266 = vunpack.c.h.b16 %v243
  %v267 = vunpack.c.l.b16 %v244
  %v268 = vunpack.c.h.b16 %v244
  %v269 = vpack.c.b16 %v253, %v253
  %v270 = vpack.c.b16 %v254, %v254
  %v271 = vpack.c.b16 %v255, %v255
  %v272 = vpack.c.b16 %v256, %v256
  %v273 = vpack.c.b16 %v257, %v257
  %v274 = vpack.c.b16 %v258, %v258
  %v275 = vpack.c.b16 %v259, %v259
  %v276 = vpack.c.b16 %v260, %v260
  %v277 = vpack.c.b16 %v261, %v261
  %v278 = vpack.c.b16 %v262, %v262
  %v279 = vpack.c.b16 %v263, %v263
  %v280 = vpack.c.b16 %v264, %v264
  %v281 = vpack.c.b16 %v265, %v265
  %v282 = vpack.c.b16 %v266, %v266
  %v283 = vpack.c.b16 %v267, %v267
  %v284 = vpack.c.b16 %v268, %v268
  %301 = vst [vmem:[%s2] sm:$0xf] %v269
  %302 = vst [vmem:[%s2 + $0x4] sm:$0xf] %v270
  %303 = vst [vmem:[%s2 + $0x8] sm:$0xf] %v271
  %304 = vst [vmem:[%s2 + $0xc] sm:$0xf] %v272
  %305 = vst [vmem:[%s2 + $0x10] sm:$0xf] %v273
  %306 = vst [vmem:[%s2 + $0x14] sm:$0xf] %v274
  %307 = vst [vmem:[%s2 + $0x18] sm:$0xf] %v275
  %308 = vst [vmem:[%s2 + $0x1c] sm:$0xf] %v276
  %309 = vst [vmem:[%s2 + $0x20] sm:$0xf] %v277
  %310 = vst [vmem:[%s2 + $0x24] sm:$0xf] %v278
  %311 = vst [vmem:[%s2 + $0x28] sm:$0xf] %v279
  %312 = vst [vmem:[%s2 + $0x2c] sm:$0xf] %v280
  %313 = vst [vmem:[%s2 + $0x30] sm:$0xf] %v281
  %314 = vst [vmem:[%s2 + $0x34] sm:$0xf] %v282
  %315 = vst [vmem:[%s2 + $0x38] sm:$0xf] %v283
  %316 = vst [vmem:[%s2 + $0x3c] sm:$0xf] %v284
  // Predicated region
  $region10: #{model_forward.6} parent=0 // pred_check
    _
  $region11: #{model_forward.6} parent=0 // pred_check_branch
    %318 = sbr.rel (0) target = $region13
  $region12: #{model_forward.6} parent=0 // pred_region
    _
  $region13: #{model_forward.6} parent=0 // pred_fallthru
    _
  // Predicated region
  $region14: #{model_forward.6} parent=0 // pred_check
    _
  $region15: #{model_forward.6} parent=0 // pred_check_branch
    %320 = sbr.rel (0) target = $region17
  $region16: #{model_forward.6} parent=0 // pred_region
    _
  $region17: #{model_forward.6} parent=0 // pred_fallthru
    _

// kernel: model_forward.8
$region0: #{model_forward.8}
  #allocation0 [shape = 'u32[]', space=smem, size = 0x4, offset = 0x4, fixed_abs, tag = 'smem constant byte address 0x4 - core index']
  #allocation1 [shape = 'u32[144,128]{1,0:T(1,128)}', space=vmem, size = 0x12000, scoped, tag = 'internal scratch']
  %s0 = inlined_call_operand.vmem [shape: bf16[128,128], index: 0, kind: input, shape index: {}]
  %s1 = inlined_call_operand.vmem [shape: f32[1,128], index: 1, kind: input, shape index: {}]
  %s2 = inlined_call_operand.vmem [shape: f32[1,128], index: 2, kind: input, shape index: {}]
  %s3 = inlined_call_operand.vmem [shape: bf16[128,128], index: 3, kind: input, shape index: {}]
  %s4 = inlined_call_operand.vmem [shape: bf16[128,128], index: 4, kind: output, shape index: {}]
  %s5 = sld [smem:[#allocation0]]
  $region26: #{model_forward.8} parent=0
    _
  %s7 = ssub.s32 1, %s5
  %s8 = scalar_select 0, %s7, %s5
  // Predicated region
  $region2: #{model_forward.8} parent=0 // pred_check
    _
  $region3: #{model_forward.8} parent=0 // pred_check_branch
    %10 = sbr.rel (0) target = $region5
  $region4: #{model_forward.8} parent=0 // pred_region
    _
  $region5: #{model_forward.8} parent=0 // pred_fallthru
    _
  // Predicated region
  $region6: #{model_forward.8} parent=0 // pred_check
    _
  $region7: #{model_forward.8} parent=0 // pred_check_branch
    %12 = sbr.rel (0) target = $region9
  $region8: #{model_forward.8} parent=0 // pred_region
    _
  $region9: #{model_forward.8} parent=0 // pred_fallthru
    _
  // Predicated region
  $region10: #{model_forward.8} parent=0 // pred_check
    _
  $region11: #{model_forward.8} parent=0 // pred_check_branch
    %14 = sbr.rel (0) target = $region13
  $region12: #{model_forward.8} parent=0 // pred_region
    _
  $region13: #{model_forward.8} parent=0 // pred_fallthru
    _
  // Predicated region
  $region14: #{model_forward.8} parent=0 // pred_check
    _
  $region15: #{model_forward.8} parent=0 // pred_check_branch
    %16 = sbr.rel (0) target = $region17
  $region16: #{model_forward.8} parent=0 // pred_region
    _
  $region17: #{model_forward.8} parent=0 // pred_fallthru
    _
  %v18 = vld [vmem:[%s0] sm:$0xf]
  %v19 = vld [vmem:[%s0 + $0x4] sm:$0xf]
  %v20 = vld [vmem:[%s0 + $0x8] sm:$0xf]
  %v21 = vld [vmem:[%s0 + $0xc] sm:$0xf]
  %v22 = vld [vmem:[%s0 + $0x10] sm:$0xf]
  %v23 = vld [vmem:[%s0 + $0x14] sm:$0xf]
  %v24 = vld [vmem:[%s0 + $0x18] sm:$0xf]
  %v25 = vld [vmem:[%s0 + $0x1c] sm:$0xf]
  %v26 = vld [vmem:[%s0 + $0x20] sm:$0xf]
  %v27 = vld [vmem:[%s0 + $0x24] sm:$0xf]
  %v28 = vld [vmem:[%s0 + $0x28] sm:$0xf]
  %v29 = vld [vmem:[%s0 + $0x2c] sm:$0xf]
  %v30 = vld [vmem:[%s0 + $0x30] sm:$0xf]
  %v31 = vld [vmem:[%s0 + $0x34] sm:$0xf]
  %v32 = vld [vmem:[%s0 + $0x38] sm:$0xf]
  %v33 = vld [vmem:[%s0 + $0x3c] sm:$0xf]
  %v34 = vunpack.c.l.bf16 %v18
  %v35 = vunpack.c.l.bf16 %v19
  %v36 = vunpack.c.l.bf16 %v20
  %v37 = vunpack.c.l.bf16 %v21
  %v38 = vunpack.c.l.bf16 %v22
  %v39 = vunpack.c.l.bf16 %v23
  %v40 = vunpack.c.l.bf16 %v24
  %v41 = vunpack.c.l.bf16 %v25
  %v42 = vunpack.c.l.bf16 %v26
  %v43 = vunpack.c.l.bf16 %v27
  %v44 = vunpack.c.l.bf16 %v28
  %v45 = vunpack.c.l.bf16 %v29
  %v46 = vunpack.c.l.bf16 %v30
  %v47 = vunpack.c.l.bf16 %v31
  %v48 = vunpack.c.l.bf16 %v32
  %v49 = vunpack.c.l.bf16 %v33
  %v50 = vld [vmem:[%s1] sm:$0x1]
  %v52 = vlaneseq
  %v53 = vshrl.u32 %v52, 7
  %v54 = vsub.s32 0, %v53
  %v55 = vrot.slane %v50, %v54
  %v57 = vmul.f32 %v34, %v55
  %v58 = vmul.f32 %v35, %v55
  %v59 = vmul.f32 %v36, %v55
  %v60 = vmul.f32 %v37, %v55
  %v61 = vmul.f32 %v38, %v55
  %v62 = vmul.f32 %v39, %v55
  %v63 = vmul.f32 %v40, %v55
  %v64 = vmul.f32 %v41, %v55
  %v65 = vmul.f32 %v42, %v55
  %v66 = vmul.f32 %v43, %v55
  %v67 = vmul.f32 %v44, %v55
  %v68 = vmul.f32 %v45, %v55
  %v69 = vmul.f32 %v46, %v55
  %v70 = vmul.f32 %v47, %v55
  %v71 = vmul.f32 %v48, %v55
  %v72 = vmul.f32 %v49, %v55
  %v73 = vld [vmem:[%s2] sm:$0x1]
  %v75 = vlaneseq
  %v76 = vshrl.u32 %v75, 7
  %v77 = vsub.s32 0, %v76
  %v78 = vrot.slane %v73, %v77
  %v80 = vadd.f32 %v57, %v78
  %v81 = vadd.f32 %v58, %v78
  %v82 = vadd.f32 %v59, %v78
  %v83 = vadd.f32 %v60, %v78
  %v84 = vadd.f32 %v61, %v78
  %v85 = vadd.f32 %v62, %v78
  %v86 = vadd.f32 %v63, %v78
  %v87 = vadd.f32 %v64, %v78
  %v88 = vadd.f32 %v65, %v78
  %v89 = vadd.f32 %v66, %v78
  %v90 = vadd.f32 %v67, %v78
  %v91 = vadd.f32 %v68, %v78
  %v92 = vadd.f32 %v69, %v78
  %v93 = vadd.f32 %v70, %v78
  %v94 = vadd.f32 %v71, %v78
  %v95 = vadd.f32 %v72, %v78
  %v96 = vmax.f32 %v80, 0.0
  %v97 = vmax.f32 %v81, 0.0
  %v98 = vmax.f32 %v82, 0.0
  %v99 = vmax.f32 %v83, 0.0
  %v100 = vmax.f32 %v84, 0.0
  %v101 = vmax.f32 %v85, 0.0
  %v102 = vmax.f32 %v86, 0.0
  %v103 = vmax.f32 %v87, 0.0
  %v104 = vmax.f32 %v88, 0.0
  %v105 = vmax.f32 %v89, 0.0
  %v106 = vmax.f32 %v90, 0.0
  %v107 = vmax.f32 %v91, 0.0
  %v108 = vmax.f32 %v92, 0.0
  %v109 = vmax.f32 %v93, 0.0
  %v110 = vmax.f32 %v94, 0.0
  %v111 = vmax.f32 %v95, 0.0
  %v112 = vpack.c.bf16 %v97, %v96
  %v113 = vpack.c.bf16 %v99, %v98
  %v114 = vpack.c.bf16 %v101, %v100
  %v115 = vpack.c.bf16 %v103, %v102
  %v116 = vpack.c.bf16 %v105, %v104
  %v117 = vpack.c.bf16 %v107, %v106
  %v118 = vpack.c.bf16 %v109, %v108
  %v119 = vpack.c.bf16 %v111, %v110
  %v120 = vld [vmem:[%s3] sm:$0xf]
  %v121 = vld [vmem:[%s3 + $0x4] sm:$0xf]
  %v122 = vld [vmem:[%s3 + $0x8] sm:$0xf]
  %v123 = vld [vmem:[%s3 + $0xc] sm:$0xf]
  %v124 = vld [vmem:[%s3 + $0x10] sm:$0xf]
  %v125 = vld [vmem:[%s3 + $0x14] sm:$0xf]
  %v126 = vld [vmem:[%s3 + $0x18] sm:$0xf]
  %v127 = vld [vmem:[%s3 + $0x1c] sm:$0xf]
  %v128 = vld [vmem:[%s3 + $0x20] sm:$0xf]
  %v129 = vld [vmem:[%s3 + $0x24] sm:$0xf]
  %v130 = vld [vmem:[%s3 + $0x28] sm:$0xf]
  %v131 = vld [vmem:[%s3 + $0x2c] sm:$0xf]
  %v132 = vld [vmem:[%s3 + $0x30] sm:$0xf]
  %v133 = vld [vmem:[%s3 + $0x34] sm:$0xf]
  %v134 = vld [vmem:[%s3 + $0x38] sm:$0xf]
  %v135 = vld [vmem:[%s3 + $0x3c] sm:$0xf]
  %v152 = vunpack.c.l.b16 %v120
  %v153 = vunpack.c.l.b16 %v121
  %v154 = vunpack.c.l.b16 %v122
  %v155 = vunpack.c.l.b16 %v123
  %v156 = vunpack.c.l.b16 %v124
  %v157 = vunpack.c.l.b16 %v125
  %v158 = vunpack.c.l.b16 %v126
  %v159 = vunpack.c.l.b16 %v127
  %v160 = vunpack.c.l.b16 %v128
  %v161 = vunpack.c.l.b16 %v129
  %v162 = vunpack.c.l.b16 %v130
  %v163 = vunpack.c.l.b16 %v131
  %v164 = vunpack.c.l.b16 %v132
  %v165 = vunpack.c.l.b16 %v133
  %v166 = vunpack.c.l.b16 %v134
  %v167 = vunpack.c.l.b16 %v135
  %v168 = vpack.c.b16 %v153, %v152
  %v169 = vpack.c.b16 %v155, %v154
  %v170 = vpack.c.b16 %v157, %v156
  %v171 = vpack.c.b16 %v159, %v158
  %v172 = vpack.c.b16 %v161, %v160
  %v173 = vpack.c.b16 %v163, %v162
  %v174 = vpack.c.b16 %v165, %v164
  %v175 = vpack.c.b16 %v167, %v166
  %184 = vmatprep.subr.bf16.mxu0 0
  %185 = vmatpush1.bf16.msra.mxu0 %v175
  %186 = vmatprep.subr.bf16.mxu0 0
  %187 = vmatpush1.bf16.msra.mxu0 %v174
  %188 = vmatprep.subr.bf16.mxu0 0
  %189 = vmatpush1.bf16.msra.mxu0 %v173
  %190 = vmatprep.subr.bf16.mxu0 0
  %191 = vmatpush1.bf16.msra.mxu0 %v172
  %192 = vmatprep.subr.bf16.mxu0 0
  %193 = vmatpush1.bf16.msra.mxu0 %v171
  %194 = vmatprep.subr.bf16.mxu0 0
  %195 = vmatpush1.bf16.msra.mxu0 %v170
  %196 = vmatprep.subr.bf16.mxu0 0
  %197 = vmatpush1.bf16.msra.mxu0 %v169
  %198 = vmatprep.subr.bf16.mxu0 0
  %199 = vmatpush1.bf16.msra.mxu0 %v168
  %200 = vmatprep.subr.bf16.mxu0 0
  %201 = vmatpush2.bf16.msra.mxu0 0
  %202 = vmatprep.subr.bf16.mxu0 0
  %203 = vmatpush2.bf16.msra.mxu0 0
  %204 = vmatprep.subr.bf16.mxu0 0
  %205 = vmatpush2.bf16.msra.mxu0 0
  %206 = vmatprep.subr.bf16.mxu0 0
  %207 = vmatpush2.bf16.msra.mxu0 0
  %208 = vmatprep.subr.bf16.mxu0 0
  %209 = vmatpush2.bf16.msra.mxu0 0
  %210 = vmatprep.subr.bf16.mxu0 0
  %211 = vmatpush2.bf16.msra.mxu0 0
  %212 = vmatprep.subr.bf16.mxu0 0
  %213 = vmatpush2.bf16.msra.mxu0 0
  %214 = vmatprep.subr.bf16.mxu0 0
  %215 = vmatpush2.bf16.msra.mxu0 0
  %216 = vmatprep.mubr.bf16.mxu0 0
  %217 = vmatmul.mubr.bf16.gmra.mxu0 %v112
  %v218 = vpop.f32.mrf.mxu0
  %v219 = vadd.f32 0.0, %v218
  %v220 = vpop.f32.mrf.mxu0
  %v221 = vpop.f32.mrf.mxu0
  %v222 = vadd.f32 0.0, %v221
  %v223 = vpop.f32.mrf.mxu0
  %224 = vmatprep.mubr.bf16.mxu0 0
  %225 = vmatmul.mubr.bf16.gmra.mxu0 %v113
  %v226 = vpop.f32.mrf.mxu0
  %v227 = vadd.f32 0.0, %v226
  %v228 = vpop.f32.mrf.mxu0
  %v229 = vpop.f32.mrf.mxu0
  %v230 = vadd.f32 0.0, %v229
  %v231 = vpop.f32.mrf.mxu0
  %232 = vmatprep.mubr.bf16.mxu0 0
  %233 = vmatmul.mubr.bf16.gmra.mxu0 %v114
  %v234 = vpop.f32.mrf.mxu0
  %v235 = vadd.f32 0.0, %v234
  %v236 = vpop.f32.mrf.mxu0
  %v237 = vpop.f32.mrf.mxu0
  %v238 = vadd.f32 0.0, %v237
  %v239 = vpop.f32.mrf.mxu0
  %240 = vmatprep.mubr.bf16.mxu0 0
  %241 = vmatmul.mubr.bf16.gmra.mxu0 %v115
  %v242 = vpop.f32.mrf.mxu0
  %v243 = vadd.f32 0.0, %v242
  %v244 = vpop.f32.mrf.mxu0
  %v245 = vpop.f32.mrf.mxu0
  %v246 = vadd.f32 0.0, %v245
  %v247 = vpop.f32.mrf.mxu0
  %248 = vmatprep.mubr.bf16.mxu0 0
  %249 = vmatmul.mubr.bf16.gmra.mxu0 %v116
  %v250 = vpop.f32.mrf.mxu0
  %v251 = vadd.f32 0.0, %v250
  %v252 = vpop.f32.mrf.mxu0
  %v253 = vpop.f32.mrf.mxu0
  %v254 = vadd.f32 0.0, %v253
  %v255 = vpop.f32.mrf.mxu0
  %256 = vmatprep.mubr.bf16.mxu0 0
  %257 = vmatmul.mubr.bf16.gmra.mxu0 %v117
  %v258 = vpop.f32.mrf.mxu0
  %v259 = vadd.f32 0.0, %v258
  %v260 = vpop.f32.mrf.mxu0
  %v261 = vpop.f32.mrf.mxu0
  %v262 = vadd.f32 0.0, %v261
  %v263 = vpop.f32.mrf.mxu0
  %264 = vmatprep.mubr.bf16.mxu0 0
  %265 = vmatmul.mubr.bf16.gmra.mxu0 %v118
  %v266 = vpop.f32.mrf.mxu0
  %v267 = vadd.f32 0.0, %v266
  %v268 = vpop.f32.mrf.mxu0
  %v269 = vpop.f32.mrf.mxu0
  %v270 = vadd.f32 0.0, %v269
  %v271 = vpop.f32.mrf.mxu0
  %272 = vmatprep.mubr.bf16.mxu0 0
  %273 = vmatmul.mubr.bf16.gmra.mxu0 %v119
  %v274 = vpop.f32.mrf.mxu0
  %v275 = vadd.f32 0.0, %v274
  %v276 = vpop.f32.mrf.mxu0
  %v277 = vpop.f32.mrf.mxu0
  %v278 = vadd.f32 0.0, %v277
  %v279 = vpop.f32.mrf.mxu0
  %280 = vdwg.mxu0
  %v281 = vpack.c.bf16 %v222, %v219
  %v282 = vpack.c.bf16 %v230, %v227
  %v283 = vpack.c.bf16 %v238, %v235
  %v284 = vpack.c.bf16 %v246, %v243
  %v285 = vpack.c.bf16 %v254, %v251
  %v286 = vpack.c.bf16 %v262, %v259
  %v287 = vpack.c.bf16 %v270, %v267
  %v288 = vpack.c.bf16 %v278, %v275
  %v297 = vunpack.c.l.b16 %v281
  %v298 = vunpack.c.h.b16 %v281
  %v299 = vunpack.c.l.b16 %v282
  %v300 = vunpack.c.h.b16 %v282
  %v301 = vunpack.c.l.b16 %v283
  %v302 = vunpack.c.h.b16 %v283
  %v303 = vunpack.c.l.b16 %v284
  %v304 = vunpack.c.h.b16 %v284
  %v305 = vunpack.c.l.b16 %v285
  %v306 = vunpack.c.h.b16 %v285
  %v307 = vunpack.c.l.b16 %v286
  %v308 = vunpack.c.h.b16 %v286
  %v309 = vunpack.c.l.b16 %v287
  %v310 = vunpack.c.h.b16 %v287
  %v311 = vunpack.c.l.b16 %v288
  %v312 = vunpack.c.h.b16 %v288
  %v313 = vpack.c.b16 %v297, %v297
  %v314 = vpack.c.b16 %v298, %v298
  %v315 = vpack.c.b16 %v299, %v299
  %v316 = vpack.c.b16 %v300, %v300
  %v317 = vpack.c.b16 %v301, %v301
  %v318 = vpack.c.b16 %v302, %v302
  %v319 = vpack.c.b16 %v303, %v303
  %v320 = vpack.c.b16 %v304, %v304
  %v321 = vpack.c.b16 %v305, %v305
  %v322 = vpack.c.b16 %v306, %v306
  %v323 = vpack.c.b16 %v307, %v307
  %v324 = vpack.c.b16 %v308, %v308
  %v325 = vpack.c.b16 %v309, %v309
  %v326 = vpack.c.b16 %v310, %v310
  %v327 = vpack.c.b16 %v311, %v311
  %v328 = vpack.c.b16 %v312, %v312
  %345 = vst [vmem:[%s4] sm:$0xf] %v313
  %346 = vst [vmem:[%s4 + $0x4] sm:$0xf] %v314
  %347 = vst [vmem:[%s4 + $0x8] sm:$0xf] %v315
  %348 = vst [vmem:[%s4 + $0xc] sm:$0xf] %v316
  %349 = vst [vmem:[%s4 + $0x10] sm:$0xf] %v317
  %350 = vst [vmem:[%s4 + $0x14] sm:$0xf] %v318
  %351 = vst [vmem:[%s4 + $0x18] sm:$0xf] %v319
  %352 = vst [vmem:[%s4 + $0x1c] sm:$0xf] %v320
  %353 = vst [vmem:[%s4 + $0x20] sm:$0xf] %v321
  %354 = vst [vmem:[%s4 + $0x24] sm:$0xf] %v322
  %355 = vst [vmem:[%s4 + $0x28] sm:$0xf] %v323
  %356 = vst [vmem:[%s4 + $0x2c] sm:$0xf] %v324
  %357 = vst [vmem:[%s4 + $0x30] sm:$0xf] %v325
  %358 = vst [vmem:[%s4 + $0x34] sm:$0xf] %v326
  %359 = vst [vmem:[%s4 + $0x38] sm:$0xf] %v327
  %360 = vst [vmem:[%s4 + $0x3c] sm:$0xf] %v328
  // Predicated region
  $region18: #{model_forward.8} parent=0 // pred_check
    _
  $region19: #{model_forward.8} parent=0 // pred_check_branch
    %362 = sbr.rel (0) target = $region21
  $region20: #{model_forward.8} parent=0 // pred_region
    _
  $region21: #{model_forward.8} parent=0 // pred_fallthru
    _
  // Predicated region
  $region22: #{model_forward.8} parent=0 // pred_check
    _
  $region23: #{model_forward.8} parent=0 // pred_check_branch
    %364 = sbr.rel (0) target = $region25
  $region24: #{model_forward.8} parent=0 // pred_region
    _
  $region25: #{model_forward.8} parent=0 // pred_fallthru
    _

// kernel: model_forward.7
$region0: #{model_forward.7}
  #allocation0 [shape = 'u32[]', space=smem, size = 0x4, offset = 0x4, fixed_abs, tag = 'smem constant byte address 0x4 - core index']
  #allocation1 [shape = 'u32[144,128]{1,0:T(1,128)}', space=vmem, size = 0x12000, scoped, tag = 'internal scratch']
  #allocation2 [shape = 'f32[128,128]{1,0:T(8,128)}', space=vmem, size = 0x10000, scoped, tag = 'scratch operand']
  %s0 = inlined_call_operand.vmem [shape: bf16[128,128], index: 0, kind: input, shape index: {}]
  %s1 = inlined_call_operand.vmem [shape: bf16[128,128], index: 1, kind: input, shape index: {}]
  %s2 = inlined_call_operand.vmem [shape: bf16[128,128], index: 2, kind: output, shape index: {0}]
  %s3 = inlined_call_operand.vmem [shape: f32[1,1,128], index: 3, kind: output, shape index: {1}]
  %s4 = inlined_call_operand.vmem [shape: f32[1,1,128], index: 4, kind: output, shape index: {2}]
  %5 = xla_tuple %s2, %s3, %s4
  %s6 = sld [smem:[#allocation0]]
  $region42: #{model_forward.7} parent=0
    _
  %s8 = ssub.s32 1, %s6
  %s9 = scalar_select 0, %s8, %s6
  // Predicated region
  $region2: #{model_forward.7} parent=0 // pred_check
    _
  $region3: #{model_forward.7} parent=0 // pred_check_branch
    %11 = sbr.rel (0) target = $region5
  $region4: #{model_forward.7} parent=0 // pred_region
    _
  $region5: #{model_forward.7} parent=0 // pred_fallthru
    _
  // Predicated region
  $region6: #{model_forward.7} parent=0 // pred_check
    _
  $region7: #{model_forward.7} parent=0 // pred_check_branch
    %13 = sbr.rel (0) target = $region9
  $region8: #{model_forward.7} parent=0 // pred_region
    _
  $region9: #{model_forward.7} parent=0 // pred_fallthru
    _
  %p15 = scmp.eq.s32.totalorder 0, 0
  // Predicated region
  $region10: #{model_forward.7} parent=0 // pred_check
    %p16 = pneg %p15
  $region11: #{model_forward.7} parent=0 // pred_check_branch
    %18 = sbr.rel (%p16) target = $region13
  $region12: #{model_forward.7} parent=0 // pred_region
    %19 = vst [vmem:[#allocation2] sm:$0xff] 0.0
    %20 = vst [vmem:[#allocation2 + $0x8] sm:$0xff] 0.0
    %21 = vst [vmem:[#allocation2 + $0x10] sm:$0xff] 0.0
    %22 = vst [vmem:[#allocation2 + $0x18] sm:$0xff] 0.0
    %23 = vst [vmem:[#allocation2 + $0x20] sm:$0xff] 0.0
    %24 = vst [vmem:[#allocation2 + $0x28] sm:$0xff] 0.0
    %25 = vst [vmem:[#allocation2 + $0x30] sm:$0xff] 0.0
    %26 = vst [vmem:[#allocation2 + $0x38] sm:$0xff] 0.0
    %27 = vst [vmem:[#allocation2 + $0x40] sm:$0xff] 0.0
    %28 = vst [vmem:[#allocation2 + $0x48] sm:$0xff] 0.0
    %29 = vst [vmem:[#allocation2 + $0x50] sm:$0xff] 0.0
    %30 = vst [vmem:[#allocation2 + $0x58] sm:$0xff] 0.0
    %31 = vst [vmem:[#allocation2 + $0x60] sm:$0xff] 0.0
    %32 = vst [vmem:[#allocation2 + $0x68] sm:$0xff] 0.0
    %33 = vst [vmem:[#allocation2 + $0x70] sm:$0xff] 0.0
    %34 = vst [vmem:[#allocation2 + $0x78] sm:$0xff] 0.0
  $region13: #{model_forward.7} parent=0 // pred_fallthru
    _
  %v35 = vld [vmem:[#allocation2] sm:$0xff]
  %v36 = vld [vmem:[#allocation2 + $0x8] sm:$0xff]
  %v37 = vld [vmem:[#allocation2 + $0x10] sm:$0xff]
  %v38 = vld [vmem:[#allocation2 + $0x18] sm:$0xff]
  %v39 = vld [vmem:[#allocation2 + $0x20] sm:$0xff]
  %v40 = vld [vmem:[#allocation2 + $0x28] sm:$0xff]
  %v41 = vld [vmem:[#allocation2 + $0x30] sm:$0xff]
  %v42 = vld [vmem:[#allocation2 + $0x38] sm:$0xff]
  %v43 = vld [vmem:[#allocation2 + $0x40] sm:$0xff]
  %v44 = vld [vmem:[#allocation2 + $0x48] sm:$0xff]
  %v45 = vld [vmem:[#allocation2 + $0x50] sm:$0xff]
  %v46 = vld [vmem:[#allocation2 + $0x58] sm:$0xff]
  %v47 = vld [vmem:[#allocation2 + $0x60] sm:$0xff]
  %v48 = vld [vmem:[#allocation2 + $0x68] sm:$0xff]
  %v49 = vld [vmem:[#allocation2 + $0x70] sm:$0xff]
  %v50 = vld [vmem:[#allocation2 + $0x78] sm:$0xff]
  %v51 = vld [vmem:[%s0] sm:$0xf]
  %v52 = vld [vmem:[%s0 + $0x4] sm:$0xf]
  %v53 = vld [vmem:[%s0 + $0x8] sm:$0xf]
  %v54 = vld [vmem:[%s0 + $0xc] sm:$0xf]
  %v55 = vld [vmem:[%s0 + $0x10] sm:$0xf]
  %v56 = vld [vmem:[%s0 + $0x14] sm:$0xf]
  %v57 = vld [vmem:[%s0 + $0x18] sm:$0xf]
  %v58 = vld [vmem:[%s0 + $0x1c] sm:$0xf]
  %v59 = vld [vmem:[%s0 + $0x20] sm:$0xf]
  %v60 = vld [vmem:[%s0 + $0x24] sm:$0xf]
  %v61 = vld [vmem:[%s0 + $0x28] sm:$0xf]
  %v62 = vld [vmem:[%s0 + $0x2c] sm:$0xf]
  %v63 = vld [vmem:[%s0 + $0x30] sm:$0xf]
  %v64 = vld [vmem:[%s0 + $0x34] sm:$0xf]
  %v65 = vld [vmem:[%s0 + $0x38] sm:$0xf]
  %v66 = vld [vmem:[%s0 + $0x3c] sm:$0xf]
  %v67 = vld [vmem:[%s1] sm:$0xf]
  %v68 = vld [vmem:[%s1 + $0x4] sm:$0xf]
  %v69 = vld [vmem:[%s1 + $0x8] sm:$0xf]
  %v70 = vld [vmem:[%s1 + $0xc] sm:$0xf]
  %v71 = vld [vmem:[%s1 + $0x10] sm:$0xf]
  %v72 = vld [vmem:[%s1 + $0x14] sm:$0xf]
  %v73 = vld [vmem:[%s1 + $0x18] sm:$0xf]
  %v74 = vld [vmem:[%s1 + $0x1c] sm:$0xf]
  %v75 = vld [vmem:[%s1 + $0x20] sm:$0xf]
  %v76 = vld [vmem:[%s1 + $0x24] sm:$0xf]
  %v77 = vld [vmem:[%s1 + $0x28] sm:$0xf]
  %v78 = vld [vmem:[%s1 + $0x2c] sm:$0xf]
  %v79 = vld [vmem:[%s1 + $0x30] sm:$0xf]
  %v80 = vld [vmem:[%s1 + $0x34] sm:$0xf]
  %v81 = vld [vmem:[%s1 + $0x38] sm:$0xf]
  %v82 = vld [vmem:[%s1 + $0x3c] sm:$0xf]
  %v99 = vunpack.c.l.b16 %v51
  %v100 = vunpack.c.l.b16 %v52
  %v101 = vunpack.c.l.b16 %v53
  %v102 = vunpack.c.l.b16 %v54
  %v103 = vunpack.c.l.b16 %v55
  %v104 = vunpack.c.l.b16 %v56
  %v105 = vunpack.c.l.b16 %v57
  %v106 = vunpack.c.l.b16 %v58
  %v107 = vunpack.c.l.b16 %v59
  %v108 = vunpack.c.l.b16 %v60
  %v109 = vunpack.c.l.b16 %v61
  %v110 = vunpack.c.l.b16 %v62
  %v111 = vunpack.c.l.b16 %v63
  %v112 = vunpack.c.l.b16 %v64
  %v113 = vunpack.c.l.b16 %v65
  %v114 = vunpack.c.l.b16 %v66
  %v115 = vpack.c.b16 %v100, %v99
  %v116 = vpack.c.b16 %v102, %v101
  %v117 = vpack.c.b16 %v104, %v103
  %v118 = vpack.c.b16 %v106, %v105
  %v119 = vpack.c.b16 %v108, %v107
  %v120 = vpack.c.b16 %v110, %v109
  %v121 = vpack.c.b16 %v112, %v111
  %v122 = vpack.c.b16 %v114, %v113
  %v147 = vunpack.c.l.b16 %v67
  %v148 = vunpack.c.l.b16 %v68
  %v149 = vunpack.c.l.b16 %v69
  %v150 = vunpack.c.l.b16 %v70
  %v151 = vunpack.c.l.b16 %v71
  %v152 = vunpack.c.l.b16 %v72
  %v153 = vunpack.c.l.b16 %v73
  %v154 = vunpack.c.l.b16 %v74
  %v155 = vunpack.c.l.b16 %v75
  %v156 = vunpack.c.l.b16 %v76
  %v157 = vunpack.c.l.b16 %v77
  %v158 = vunpack.c.l.b16 %v78
  %v159 = vunpack.c.l.b16 %v79
  %v160 = vunpack.c.l.b16 %v80
  %v161 = vunpack.c.l.b16 %v81
  %v162 = vunpack.c.l.b16 %v82
  %v163 = vpack.c.b16 %v148, %v147
  %v164 = vpack.c.b16 %v150, %v149
  %v165 = vpack.c.b16 %v152, %v151
  %v166 = vpack.c.b16 %v154, %v153
  %v167 = vpack.c.b16 %v156, %v155
  %v168 = vpack.c.b16 %v158, %v157
  %v169 = vpack.c.b16 %v160, %v159
  %v170 = vpack.c.b16 %v162, %v161
  %179 = vmatprep.subr.bf16.mxu0 0
  %180 = vmatpush1.bf16.msra.mxu0 %v170
  %181 = vmatprep.subr.bf16.mxu0 0
  %182 = vmatpush1.bf16.msra.mxu0 %v169
  %183 = vmatprep.subr.bf16.mxu0 0
  %184 = vmatpush1.bf16.msra.mxu0 %v168
  %185 = vmatprep.subr.bf16.mxu0 0
  %186 = vmatpush1.bf16.msra.mxu0 %v167
  %187 = vmatprep.subr.bf16.mxu0 0
  %188 = vmatpush1.bf16.msra.mxu0 %v166
  %189 = vmatprep.subr.bf16.mxu0 0
  %190 = vmatpush1.bf16.msra.mxu0 %v165
  %191 = vmatprep.subr.bf16.mxu0 0
  %192 = vmatpush1.bf16.msra.mxu0 %v164
  %193 = vmatprep.subr.bf16.mxu0 0
  %194 = vmatpush1.bf16.msra.mxu0 %v163
  %195 = vmatprep.subr.bf16.mxu0 0
  %196 = vmatpush2.bf16.msra.mxu0 0
  %197 = vmatprep.subr.bf16.mxu0 0
  %198 = vmatpush2.bf16.msra.mxu0 0
  %199 = vmatprep.subr.bf16.mxu0 0
  %200 = vmatpush2.bf16.msra.mxu0 0
  %201 = vmatprep.subr.bf16.mxu0 0
  %202 = vmatpush2.bf16.msra.mxu0 0
  %203 = vmatprep.subr.bf16.mxu0 0
  %204 = vmatpush2.bf16.msra.mxu0 0
  %205 = vmatprep.subr.bf16.mxu0 0
  %206 = vmatpush2.bf16.msra.mxu0 0
  %207 = vmatprep.subr.bf16.mxu0 0
  %208 = vmatpush2.bf16.msra.mxu0 0
  %209 = vmatprep.subr.bf16.mxu0 0
  %210 = vmatpush2.bf16.msra.mxu0 0
  %211 = vmatprep.mubr.bf16.mxu0 0
  %212 = vmatmul.mubr.bf16.gmra.mxu0 %v115
  %v213 = vpop.f32.mrf.mxu0
  %v214 = vadd.f32 0.0, %v213
  %v215 = vpop.f32.mrf.mxu0
  %v216 = vpop.f32.mrf.mxu0
  %v217 = vadd.f32 0.0, %v216
  %v218 = vpop.f32.mrf.mxu0
  %219 = vmatprep.mubr.bf16.mxu0 0
  %220 = vmatmul.mubr.bf16.gmra.mxu0 %v116
  %v221 = vpop.f32.mrf.mxu0
  %v222 = vadd.f32 0.0, %v221
  %v223 = vpop.f32.mrf.mxu0
  %v224 = vpop.f32.mrf.mxu0
  %v225 = vadd.f32 0.0, %v224
  %v226 = vpop.f32.mrf.mxu0
  %227 = vmatprep.mubr.bf16.mxu0 0
  %228 = vmatmul.mubr.bf16.gmra.mxu0 %v117
  %v229 = vpop.f32.mrf.mxu0
  %v230 = vadd.f32 0.0, %v229
  %v231 = vpop.f32.mrf.mxu0
  %v232 = vpop.f32.mrf.mxu0
  %v233 = vadd.f32 0.0, %v232
  %v234 = vpop.f32.mrf.mxu0
  %235 = vmatprep.mubr.bf16.mxu0 0
  %236 = vmatmul.mubr.bf16.gmra.mxu0 %v118
  %v237 = vpop.f32.mrf.mxu0
  %v238 = vadd.f32 0.0, %v237
  %v239 = vpop.f32.mrf.mxu0
  %v240 = vpop.f32.mrf.mxu0
  %v241 = vadd.f32 0.0, %v240
  %v242 = vpop.f32.mrf.mxu0
  %243 = vmatprep.mubr.bf16.mxu0 0
  %244 = vmatmul.mubr.bf16.gmra.mxu0 %v119
  %v245 = vpop.f32.mrf.mxu0
  %v246 = vadd.f32 0.0, %v245
  %v247 = vpop.f32.mrf.mxu0
  %v248 = vpop.f32.mrf.mxu0
  %v249 = vadd.f32 0.0, %v248
  %v250 = vpop.f32.mrf.mxu0
  %251 = vmatprep.mubr.bf16.mxu0 0
  %252 = vmatmul.mubr.bf16.gmra.mxu0 %v120
  %v253 = vpop.f32.mrf.mxu0
  %v254 = vadd.f32 0.0, %v253
  %v255 = vpop.f32.mrf.mxu0
  %v256 = vpop.f32.mrf.mxu0
  %v257 = vadd.f32 0.0, %v256
  %v258 = vpop.f32.mrf.mxu0
  %259 = vmatprep.mubr.bf16.mxu0 0
  %260 = vmatmul.mubr.bf16.gmra.mxu0 %v121
  %v261 = vpop.f32.mrf.mxu0
  %v262 = vadd.f32 0.0, %v261
  %v263 = vpop.f32.mrf.mxu0
  %v264 = vpop.f32.mrf.mxu0
  %v265 = vadd.f32 0.0, %v264
  %v266 = vpop.f32.mrf.mxu0
  %267 = vmatprep.mubr.bf16.mxu0 0
  %268 = vmatmul.mubr.bf16.gmra.mxu0 %v122
  %v269 = vpop.f32.mrf.mxu0
  %v270 = vadd.f32 0.0, %v269
  %v271 = vpop.f32.mrf.mxu0
  %v272 = vpop.f32.mrf.mxu0
  %v273 = vadd.f32 0.0, %v272
  %v274 = vpop.f32.mrf.mxu0
  %275 = vdwg.mxu0
  %v276 = vadd.f32 %v35, %v214
  %v277 = vadd.f32 %v36, %v217
  %v278 = vadd.f32 %v37, %v222
  %v279 = vadd.f32 %v38, %v225
  %v280 = vadd.f32 %v39, %v230
  %v281 = vadd.f32 %v40, %v233
  %v282 = vadd.f32 %v41, %v238
  %v283 = vadd.f32 %v42, %v241
  %v284 = vadd.f32 %v43, %v246
  %v285 = vadd.f32 %v44, %v249
  %v286 = vadd.f32 %v45, %v254
  %v287 = vadd.f32 %v46, %v257
  %v288 = vadd.f32 %v47, %v262
  %v289 = vadd.f32 %v48, %v265
  %v290 = vadd.f32 %v49, %v270
  %v291 = vadd.f32 %v50, %v273
  %292 = vst [vmem:[#allocation2] sm:$0xff] %v276
  %293 = vst [vmem:[#allocation2 + $0x8] sm:$0xff] %v277
  %294 = vst [vmem:[#allocation2 + $0x10] sm:$0xff] %v278
  %295 = vst [vmem:[#allocation2 + $0x18] sm:$0xff] %v279
  %296 = vst [vmem:[#allocation2 + $0x20] sm:$0xff] %v280
  %297 = vst [vmem:[#allocation2 + $0x28] sm:$0xff] %v281
  %298 = vst [vmem:[#allocation2 + $0x30] sm:$0xff] %v282
  %299 = vst [vmem:[#allocation2 + $0x38] sm:$0xff] %v283
  %300 = vst [vmem:[#allocation2 + $0x40] sm:$0xff] %v284
  %301 = vst [vmem:[#allocation2 + $0x48] sm:$0xff] %v285
  %302 = vst [vmem:[#allocation2 + $0x50] sm:$0xff] %v286
  %303 = vst [vmem:[#allocation2 + $0x58] sm:$0xff] %v287
  %304 = vst [vmem:[#allocation2 + $0x60] sm:$0xff] %v288
  %305 = vst [vmem:[#allocation2 + $0x68] sm:$0xff] %v289
  %306 = vst [vmem:[#allocation2 + $0x70] sm:$0xff] %v290
  %307 = vst [vmem:[#allocation2 + $0x78] sm:$0xff] %v291
  // Predicated region
  $region14: #{model_forward.7} parent=0 // pred_check
    %p308 = pneg %p15
  $region15: #{model_forward.7} parent=0 // pred_check_branch
    %310 = sbr.rel (%p308) target = $region17
  $region16: #{model_forward.7} parent=0 // pred_region
    %v311 = vld [vmem:[#allocation2] sm:$0xff]
    %v312 = vld [vmem:[#allocation2 + $0x8] sm:$0xff]
    %v313 = vld [vmem:[#allocation2 + $0x10] sm:$0xff]
    %v314 = vld [vmem:[#allocation2 + $0x18] sm:$0xff]
    %v315 = vld [vmem:[#allocation2 + $0x20] sm:$0xff]
    %v316 = vld [vmem:[#allocation2 + $0x28] sm:$0xff]
    %v317 = vld [vmem:[#allocation2 + $0x30] sm:$0xff]
    %v318 = vld [vmem:[#allocation2 + $0x38] sm:$0xff]
    %v319 = vld [vmem:[#allocation2 + $0x40] sm:$0xff]
    %v320 = vld [vmem:[#allocation2 + $0x48] sm:$0xff]
    %v321 = vld [vmem:[#allocation2 + $0x50] sm:$0xff]
    %v322 = vld [vmem:[#allocation2 + $0x58] sm:$0xff]
    %v323 = vld [vmem:[#allocation2 + $0x60] sm:$0xff]
    %v324 = vld [vmem:[#allocation2 + $0x68] sm:$0xff]
    %v325 = vld [vmem:[#allocation2 + $0x70] sm:$0xff]
    %v326 = vld [vmem:[#allocation2 + $0x78] sm:$0xff]
    %v327 = vpack.c.bf16 %v312, %v311
    %v328 = vpack.c.bf16 %v314, %v313
    %v329 = vpack.c.bf16 %v316, %v315
    %v330 = vpack.c.bf16 %v318, %v317
    %v331 = vpack.c.bf16 %v320, %v319
    %v332 = vpack.c.bf16 %v322, %v321
    %v333 = vpack.c.bf16 %v324, %v323
    %v334 = vpack.c.bf16 %v326, %v325
    %v343 = vunpack.c.l.b16 %v327
    %v344 = vunpack.c.h.b16 %v327
    %v345 = vunpack.c.l.b16 %v328
    %v346 = vunpack.c.h.b16 %v328
    %v347 = vunpack.c.l.b16 %v329
    %v348 = vunpack.c.h.b16 %v329
    %v349 = vunpack.c.l.b16 %v330
    %v350 = vunpack.c.h.b16 %v330
    %v351 = vunpack.c.l.b16 %v331
    %v352 = vunpack.c.h.b16 %v331
    %v353 = vunpack.c.l.b16 %v332
    %v354 = vunpack.c.h.b16 %v332
    %v355 = vunpack.c.l.b16 %v333
    %v356 = vunpack.c.h.b16 %v333
    %v357 = vunpack.c.l.b16 %v334
    %v358 = vunpack.c.h.b16 %v334
    %v359 = vpack.c.b16 %v343, %v343
    %v360 = vpack.c.b16 %v344, %v344
    %v361 = vpack.c.b16 %v345, %v345
    %v362 = vpack.c.b16 %v346, %v346
    %v363 = vpack.c.b16 %v347, %v347
    %v364 = vpack.c.b16 %v348, %v348
    %v365 = vpack.c.b16 %v349, %v349
    %v366 = vpack.c.b16 %v350, %v350
    %v367 = vpack.c.b16 %v351, %v351
    %v368 = vpack.c.b16 %v352, %v352
    %v369 = vpack.c.b16 %v353, %v353
    %v370 = vpack.c.b16 %v354, %v354
    %v371 = vpack.c.b16 %v355, %v355
    %v372 = vpack.c.b16 %v356, %v356
    %v373 = vpack.c.b16 %v357, %v357
    %v374 = vpack.c.b16 %v358, %v358
    %391 = vst [vmem:[%s2] sm:$0xf] %v359
    %392 = vst [vmem:[%s2 + $0x4] sm:$0xf] %v360
    %393 = vst [vmem:[%s2 + $0x8] sm:$0xf] %v361
    %394 = vst [vmem:[%s2 + $0xc] sm:$0xf] %v362
    %395 = vst [vmem:[%s2 + $0x10] sm:$0xf] %v363
    %396 = vst [vmem:[%s2 + $0x14] sm:$0xf] %v364
    %397 = vst [vmem:[%s2 + $0x18] sm:$0xf] %v365
    %398 = vst [vmem:[%s2 + $0x1c] sm:$0xf] %v366
    %399 = vst [vmem:[%s2 + $0x20] sm:$0xf] %v367
    %400 = vst [vmem:[%s2 + $0x24] sm:$0xf] %v368
    %401 = vst [vmem:[%s2 + $0x28] sm:$0xf] %v369
    %402 = vst [vmem:[%s2 + $0x2c] sm:$0xf] %v370
    %403 = vst [vmem:[%s2 + $0x30] sm:$0xf] %v371
    %404 = vst [vmem:[%s2 + $0x34] sm:$0xf] %v372
    %405 = vst [vmem:[%s2 + $0x38] sm:$0xf] %v373
    %406 = vst [vmem:[%s2 + $0x3c] sm:$0xf] %v374
    %v407 = vadd.f32 %v311, %v312
    %v408 = vadd.f32 %v407, %v313
    %v409 = vadd.f32 %v408, %v314
    %v410 = vadd.f32 %v409, %v315
    %v411 = vadd.f32 %v410, %v316
    %v412 = vadd.f32 %v411, %v317
    %v413 = vadd.f32 %v412, %v318
    %v414 = vadd.f32 %v413, %v319
    %v415 = vadd.f32 %v414, %v320
    %v416 = vadd.f32 %v415, %v321
    %v417 = vadd.f32 %v416, %v322
    %v418 = vadd.f32 %v417, %v323
    %v419 = vadd.f32 %v418, %v324
    %v420 = vadd.f32 %v419, %v325
    %v421 = vadd.f32 %v420, %v326
    %v422 = vrot.slane %v421, 4
    %v423 = vadd.f32 %v421, %v422
    %v424 = vrot.slane %v423, 2
    %v425 = vadd.f32 %v423, %v424
    %v426 = vrot.slane %v425, 1
    %v427 = vadd.f32 %v425, %v426
    %428 = vst [vmem:[%s3] sm:$0x1] %v427
    %v429 = vmul.f32 %v311, %v311
    %v430 = vmul.f32 %v312, %v312
    %v431 = vmul.f32 %v313, %v313
    %v432 = vmul.f32 %v314, %v314
    %v433 = vmul.f32 %v315, %v315
    %v434 = vmul.f32 %v316, %v316
    %v435 = vmul.f32 %v317, %v317
    %v436 = vmul.f32 %v318, %v318
    %v437 = vmul.f32 %v319, %v319
    %v438 = vmul.f32 %v320, %v320
    %v439 = vmul.f32 %v321, %v321
    %v440 = vmul.f32 %v322, %v322
    %v441 = vmul.f32 %v323, %v323
    %v442 = vmul.f32 %v324, %v324
    %v443 = vmul.f32 %v325, %v325
    %v444 = vmul.f32 %v326, %v326
    %v445 = vadd.f32 %v429, %v430
    %v446 = vadd.f32 %v445, %v431
    %v447 = vadd.f32 %v446, %v432
    %v448 = vadd.f32 %v447, %v433
    %v449 = vadd.f32 %v448, %v434
    %v450 = vadd.f32 %v449, %v435
    %v451 = vadd.f32 %v450, %v436
    %v452 = vadd.f32 %v451, %v437
    %v453 = vadd.f32 %v452, %v438
    %v454 = vadd.f32 %v453, %v439
    %v455 = vadd.f32 %v454, %v440
    %v456 = vadd.f32 %v455, %v441
    %v457 = vadd.f32 %v456, %v442
    %v458 = vadd.f32 %v457, %v443
    %v459 = vadd.f32 %v458, %v444
    %v460 = vrot.slane %v459, 4
    %v461 = vadd.f32 %v459, %v460
    %v462 = vrot.slane %v461, 2
    %v463 = vadd.f32 %v461, %v462
    %v464 = vrot.slane %v463, 1
    %v465 = vadd.f32 %v463, %v464
    %466 = vst [vmem:[%s4] sm:$0x1] %v465
  $region17: #{model_forward.7} parent=0 // pred_fallthru
    _
  // Predicated region
  $region18: #{model_forward.7} parent=0 // pred_check
    _
  $region19: #{model_forward.7} parent=0 // pred_check_branch
    %468 = sbr.rel (0) target = $region21
  $region20: #{model_forward.7} parent=0 // pred_region
    _
  $region21: #{model_forward.7} parent=0 // pred_fallthru
    _
  // Predicated region
  $region22: #{model_forward.7} parent=0 // pred_check
    _
  $region23: #{model_forward.7} parent=0 // pred_check_branch
    %470 = sbr.rel (0) target = $region25
  $region24: #{model_forward.7} parent=0 // pred_region
    _
  $region25: #{model_forward.7} parent=0 // pred_fallthru
    _
  // Predicated region
  $region26: #{model_forward.7} parent=0 // pred_check
    _
  $region27: #{model_forward.7} parent=0 // pred_check_branch
    %472 = sbr.rel (0) target = $region29
  $region28: #{model_forward.7} parent=0 // pred_region
    _
  $region29: #{model_forward.7} parent=0 // pred_fallthru
    _
  // Predicated region
  $region30: #{model_forward.7} parent=0 // pred_check
    _
  $region31: #{model_forward.7} parent=0 // pred_check_branch
    %474 = sbr.rel (0) target = $region33
  $region32: #{model_forward.7} parent=0 // pred_region
    _
  $region33: #{model_forward.7} parent=0 // pred_fallthru
    _
  // Predicated region
  $region34: #{model_forward.7} parent=0 // pred_check
    _
  $region35: #{model_forward.7} parent=0 // pred_check_branch
    %476 = sbr.rel (0) target = $region37
  $region36: #{model_forward.7} parent=0 // pred_region
    _
  $region37: #{model_forward.7} parent=0 // pred_fallthru
    _
  // Predicated region
  $region38: #{model_forward.7} parent=0 // pred_check
    _
  $region39: #{model_forward.7} parent=0 // pred_check_branch
    %478 = sbr.rel (0) target = $region41
  $region40: #{model_forward.7} parent=0 // pred_region
    _
  $region41: #{model_forward.7} parent=0 // pred_fallthru
    _

// kernel: model_forward.11
$region0: #{model_forward.11}
  #allocation0 [shape = 'u32[]', space=smem, size = 0x4, offset = 0x4, fixed_abs, tag = 'smem constant byte address 0x4 - core index']
  #allocation1 [shape = 'u32[144,128]{1,0:T(1,128)}', space=vmem, size = 0x12000, scoped, tag = 'internal scratch']
  #allocation2 [shape = 'f32[128,128]{1,0:T(8,128)}', space=vmem, size = 0x10000, scoped, tag = 'scratch operand']
  %s0 = inlined_call_operand.vmem [shape: bf16[128,128], index: 0, kind: input, shape index: {}]
  %s1 = inlined_call_operand.vmem [shape: bf16[128,128], index: 1, kind: input, shape index: {}]
  %s2 = inlined_call_operand.vmem [shape: f32[1,128], index: 2, kind: input, shape index: {}]
  %s3 = inlined_call_operand.vmem [shape: f32[128,128], index: 3, kind: output, shape index: {}]
  %s4 = sld [smem:[#allocation0]]
  $region30: #{model_forward.11} parent=0
    _
  %s6 = ssub.s32 1, %s4
  %s7 = scalar_select 0, %s6, %s4
  // Predicated region
  $region2: #{model_forward.11} parent=0 // pred_check
    _
  $region3: #{model_forward.11} parent=0 // pred_check_branch
    %9 = sbr.rel (0) target = $region5
  $region4: #{model_forward.11} parent=0 // pred_region
    _
  $region5: #{model_forward.11} parent=0 // pred_fallthru
    _
  // Predicated region
  $region6: #{model_forward.11} parent=0 // pred_check
    _
  $region7: #{model_forward.11} parent=0 // pred_check_branch
    %11 = sbr.rel (0) target = $region9
  $region8: #{model_forward.11} parent=0 // pred_region
    _
  $region9: #{model_forward.11} parent=0 // pred_fallthru
    _
  // Predicated region
  $region10: #{model_forward.11} parent=0 // pred_check
    _
  $region11: #{model_forward.11} parent=0 // pred_check_branch
    %13 = sbr.rel (0) target = $region13
  $region12: #{model_forward.11} parent=0 // pred_region
    _
  $region13: #{model_forward.11} parent=0 // pred_fallthru
    _
  %p15 = scmp.eq.s32.totalorder 0, 0
  // Predicated region
  $region14: #{model_forward.11} parent=0 // pred_check
    %p16 = pneg %p15
  $region15: #{model_forward.11} parent=0 // pred_check_branch
    %18 = sbr.rel (%p16) target = $region17
  $region16: #{model_forward.11} parent=0 // pred_region
    %19 = vst [vmem:[#allocation2] sm:$0xff] 0.0
    %20 = vst [vmem:[#allocation2 + $0x8] sm:$0xff] 0.0
    %21 = vst [vmem:[#allocation2 + $0x10] sm:$0xff] 0.0
    %22 = vst [vmem:[#allocation2 + $0x18] sm:$0xff] 0.0
    %23 = vst [vmem:[#allocation2 + $0x20] sm:$0xff] 0.0
    %24 = vst [vmem:[#allocation2 + $0x28] sm:$0xff] 0.0
    %25 = vst [vmem:[#allocation2 + $0x30] sm:$0xff] 0.0
    %26 = vst [vmem:[#allocation2 + $0x38] sm:$0xff] 0.0
    %27 = vst [vmem:[#allocation2 + $0x40] sm:$0xff] 0.0
    %28 = vst [vmem:[#allocation2 + $0x48] sm:$0xff] 0.0
    %29 = vst [vmem:[#allocation2 + $0x50] sm:$0xff] 0.0
    %30 = vst [vmem:[#allocation2 + $0x58] sm:$0xff] 0.0
    %31 = vst [vmem:[#allocation2 + $0x60] sm:$0xff] 0.0
    %32 = vst [vmem:[#allocation2 + $0x68] sm:$0xff] 0.0
    %33 = vst [vmem:[#allocation2 + $0x70] sm:$0xff] 0.0
    %34 = vst [vmem:[#allocation2 + $0x78] sm:$0xff] 0.0
  $region17: #{model_forward.11} parent=0 // pred_fallthru
    _
  %v35 = vld [vmem:[#allocation2] sm:$0xff]
  %v36 = vld [vmem:[#allocation2 + $0x8] sm:$0xff]
  %v37 = vld [vmem:[#allocation2 + $0x10] sm:$0xff]
  %v38 = vld [vmem:[#allocation2 + $0x18] sm:$0xff]
  %v39 = vld [vmem:[#allocation2 + $0x20] sm:$0xff]
  %v40 = vld [vmem:[#allocation2 + $0x28] sm:$0xff]
  %v41 = vld [vmem:[#allocation2 + $0x30] sm:$0xff]
  %v42 = vld [vmem:[#allocation2 + $0x38] sm:$0xff]
  %v43 = vld [vmem:[#allocation2 + $0x40] sm:$0xff]
  %v44 = vld [vmem:[#allocation2 + $0x48] sm:$0xff]
  %v45 = vld [vmem:[#allocation2 + $0x50] sm:$0xff]
  %v46 = vld [vmem:[#allocation2 + $0x58] sm:$0xff]
  %v47 = vld [vmem:[#allocation2 + $0x60] sm:$0xff]
  %v48 = vld [vmem:[#allocation2 + $0x68] sm:$0xff]
  %v49 = vld [vmem:[#allocation2 + $0x70] sm:$0xff]
  %v50 = vld [vmem:[#allocation2 + $0x78] sm:$0xff]
  %v51 = vld [vmem:[%s0] sm:$0xf]
  %v52 = vld [vmem:[%s0 + $0x4] sm:$0xf]
  %v53 = vld [vmem:[%s0 + $0x8] sm:$0xf]
  %v54 = vld [vmem:[%s0 + $0xc] sm:$0xf]
  %v55 = vld [vmem:[%s0 + $0x10] sm:$0xf]
  %v56 = vld [vmem:[%s0 + $0x14] sm:$0xf]
  %v57 = vld [vmem:[%s0 + $0x18] sm:$0xf]
  %v58 = vld [vmem:[%s0 + $0x1c] sm:$0xf]
  %v59 = vld [vmem:[%s0 + $0x20] sm:$0xf]
  %v60 = vld [vmem:[%s0 + $0x24] sm:$0xf]
  %v61 = vld [vmem:[%s0 + $0x28] sm:$0xf]
  %v62 = vld [vmem:[%s0 + $0x2c] sm:$0xf]
  %v63 = vld [vmem:[%s0 + $0x30] sm:$0xf]
  %v64 = vld [vmem:[%s0 + $0x34] sm:$0xf]
  %v65 = vld [vmem:[%s0 + $0x38] sm:$0xf]
  %v66 = vld [vmem:[%s0 + $0x3c] sm:$0xf]
  %v67 = vld [vmem:[%s1] sm:$0xf]
  %v68 = vld [vmem:[%s1 + $0x4] sm:$0xf]
  %v69 = vld [vmem:[%s1 + $0x8] sm:$0xf]
  %v70 = vld [vmem:[%s1 + $0xc] sm:$0xf]
  %v71 = vld [vmem:[%s1 + $0x10] sm:$0xf]
  %v72 = vld [vmem:[%s1 + $0x14] sm:$0xf]
  %v73 = vld [vmem:[%s1 + $0x18] sm:$0xf]
  %v74 = vld [vmem:[%s1 + $0x1c] sm:$0xf]
  %v75 = vld [vmem:[%s1 + $0x20] sm:$0xf]
  %v76 = vld [vmem:[%s1 + $0x24] sm:$0xf]
  %v77 = vld [vmem:[%s1 + $0x28] sm:$0xf]
  %v78 = vld [vmem:[%s1 + $0x2c] sm:$0xf]
  %v79 = vld [vmem:[%s1 + $0x30] sm:$0xf]
  %v80 = vld [vmem:[%s1 + $0x34] sm:$0xf]
  %v81 = vld [vmem:[%s1 + $0x38] sm:$0xf]
  %v82 = vld [vmem:[%s1 + $0x3c] sm:$0xf]
  %v99 = vunpack.c.l.b16 %v51
  %v100 = vunpack.c.l.b16 %v52
  %v101 = vunpack.c.l.b16 %v53
  %v102 = vunpack.c.l.b16 %v54
  %v103 = vunpack.c.l.b16 %v55
  %v104 = vunpack.c.l.b16 %v56
  %v105 = vunpack.c.l.b16 %v57
  %v106 = vunpack.c.l.b16 %v58
  %v107 = vunpack.c.l.b16 %v59
  %v108 = vunpack.c.l.b16 %v60
  %v109 = vunpack.c.l.b16 %v61
  %v110 = vunpack.c.l.b16 %v62
  %v111 = vunpack.c.l.b16 %v63
  %v112 = vunpack.c.l.b16 %v64
  %v113 = vunpack.c.l.b16 %v65
  %v114 = vunpack.c.l.b16 %v66
  %v115 = vpack.c.b16 %v100, %v99
  %v116 = vpack.c.b16 %v102, %v101
  %v117 = vpack.c.b16 %v104, %v103
  %v118 = vpack.c.b16 %v106, %v105
  %v119 = vpack.c.b16 %v108, %v107
  %v120 = vpack.c.b16 %v110, %v109
  %v121 = vpack.c.b16 %v112, %v111
  %v122 = vpack.c.b16 %v114, %v113
  %v147 = vunpack.c.l.b16 %v67
  %v148 = vunpack.c.l.b16 %v68
  %v149 = vunpack.c.l.b16 %v69
  %v150 = vunpack.c.l.b16 %v70
  %v151 = vunpack.c.l.b16 %v71
  %v152 = vunpack.c.l.b16 %v72
  %v153 = vunpack.c.l.b16 %v73
  %v154 = vunpack.c.l.b16 %v74
  %v155 = vunpack.c.l.b16 %v75
  %v156 = vunpack.c.l.b16 %v76
  %v157 = vunpack.c.l.b16 %v77
  %v158 = vunpack.c.l.b16 %v78
  %v159 = vunpack.c.l.b16 %v79
  %v160 = vunpack.c.l.b16 %v80
  %v161 = vunpack.c.l.b16 %v81
  %v162 = vunpack.c.l.b16 %v82
  %v163 = vpack.c.b16 %v148, %v147
  %v164 = vpack.c.b16 %v150, %v149
  %v165 = vpack.c.b16 %v152, %v151
  %v166 = vpack.c.b16 %v154, %v153
  %v167 = vpack.c.b16 %v156, %v155
  %v168 = vpack.c.b16 %v158, %v157
  %v169 = vpack.c.b16 %v160, %v159
  %v170 = vpack.c.b16 %v162, %v161
  %179 = vmatprep.subr.bf16.mxu0 0
  %180 = vmatpush1.bf16.msra.mxu0 %v170
  %181 = vmatprep.subr.bf16.mxu0 0
  %182 = vmatpush1.bf16.msra.mxu0 %v169
  %183 = vmatprep.subr.bf16.mxu0 0
  %184 = vmatpush1.bf16.msra.mxu0 %v168
  %185 = vmatprep.subr.bf16.mxu0 0
  %186 = vmatpush1.bf16.msra.mxu0 %v167
  %187 = vmatprep.subr.bf16.mxu0 0
  %188 = vmatpush1.bf16.msra.mxu0 %v166
  %189 = vmatprep.subr.bf16.mxu0 0
  %190 = vmatpush1.bf16.msra.mxu0 %v165
  %191 = vmatprep.subr.bf16.mxu0 0
  %192 = vmatpush1.bf16.msra.mxu0 %v164
  %193 = vmatprep.subr.bf16.mxu0 0
  %194 = vmatpush1.bf16.msra.mxu0 %v163
  %195 = vmatprep.subr.bf16.mxu0 0
  %196 = vmatpush2.bf16.msra.mxu0 0
  %197 = vmatprep.subr.bf16.mxu0 0
  %198 = vmatpush2.bf16.msra.mxu0 0
  %199 = vmatprep.subr.bf16.mxu0 0
  %200 = vmatpush2.bf16.msra.mxu0 0
  %201 = vmatprep.subr.bf16.mxu0 0
  %202 = vmatpush2.bf16.msra.mxu0 0
  %203 = vmatprep.subr.bf16.mxu0 0
  %204 = vmatpush2.bf16.msra.mxu0 0
  %205 = vmatprep.subr.bf16.mxu0 0
  %206 = vmatpush2.bf16.msra.mxu0 0
  %207 = vmatprep.subr.bf16.mxu0 0
  %208 = vmatpush2.bf16.msra.mxu0 0
  %209 = vmatprep.subr.bf16.mxu0 0
  %210 = vmatpush2.bf16.msra.mxu0 0
  %211 = vmatprep.mubr.bf16.mxu0 0
  %212 = vmatmul.mubr.bf16.gmra.mxu0 %v115
  %v213 = vpop.f32.mrf.mxu0
  %v214 = vadd.f32 0.0, %v213
  %v215 = vpop.f32.mrf.mxu0
  %v216 = vpop.f32.mrf.mxu0
  %v217 = vadd.f32 0.0, %v216
  %v218 = vpop.f32.mrf.mxu0
  %219 = vmatprep.mubr.bf16.mxu0 0
  %220 = vmatmul.mubr.bf16.gmra.mxu0 %v116
  %v221 = vpop.f32.mrf.mxu0
  %v222 = vadd.f32 0.0, %v221
  %v223 = vpop.f32.mrf.mxu0
  %v224 = vpop.f32.mrf.mxu0
  %v225 = vadd.f32 0.0, %v224
  %v226 = vpop.f32.mrf.mxu0
  %227 = vmatprep.mubr.bf16.mxu0 0
  %228 = vmatmul.mubr.bf16.gmra.mxu0 %v117
  %v229 = vpop.f32.mrf.mxu0
  %v230 = vadd.f32 0.0, %v229
  %v231 = vpop.f32.mrf.mxu0
  %v232 = vpop.f32.mrf.mxu0
  %v233 = vadd.f32 0.0, %v232
  %v234 = vpop.f32.mrf.mxu0
  %235 = vmatprep.mubr.bf16.mxu0 0
  %236 = vmatmul.mubr.bf16.gmra.mxu0 %v118
  %v237 = vpop.f32.mrf.mxu0
  %v238 = vadd.f32 0.0, %v237
  %v239 = vpop.f32.mrf.mxu0
  %v240 = vpop.f32.mrf.mxu0
  %v241 = vadd.f32 0.0, %v240
  %v242 = vpop.f32.mrf.mxu0
  %243 = vmatprep.mubr.bf16.mxu0 0
  %244 = vmatmul.mubr.bf16.gmra.mxu0 %v119
  %v245 = vpop.f32.mrf.mxu0
  %v246 = vadd.f32 0.0, %v245
  %v247 = vpop.f32.mrf.mxu0
  %v248 = vpop.f32.mrf.mxu0
  %v249 = vadd.f32 0.0, %v248
  %v250 = vpop.f32.mrf.mxu0
  %251 = vmatprep.mubr.bf16.mxu0 0
  %252 = vmatmul.mubr.bf16.gmra.mxu0 %v120
  %v253 = vpop.f32.mrf.mxu0
  %v254 = vadd.f32 0.0, %v253
  %v255 = vpop.f32.mrf.mxu0
  %v256 = vpop.f32.mrf.mxu0
  %v257 = vadd.f32 0.0, %v256
  %v258 = vpop.f32.mrf.mxu0
  %259 = vmatprep.mubr.bf16.mxu0 0
  %260 = vmatmul.mubr.bf16.gmra.mxu0 %v121
  %v261 = vpop.f32.mrf.mxu0
  %v262 = vadd.f32 0.0, %v261
  %v263 = vpop.f32.mrf.mxu0
  %v264 = vpop.f32.mrf.mxu0
  %v265 = vadd.f32 0.0, %v264
  %v266 = vpop.f32.mrf.mxu0
  %267 = vmatprep.mubr.bf16.mxu0 0
  %268 = vmatmul.mubr.bf16.gmra.mxu0 %v122
  %v269 = vpop.f32.mrf.mxu0
  %v270 = vadd.f32 0.0, %v269
  %v271 = vpop.f32.mrf.mxu0
  %v272 = vpop.f32.mrf.mxu0
  %v273 = vadd.f32 0.0, %v272
  %v274 = vpop.f32.mrf.mxu0
  %275 = vdwg.mxu0
  %v276 = vadd.f32 %v35, %v214
  %v277 = vadd.f32 %v36, %v217
  %v278 = vadd.f32 %v37, %v222
  %v279 = vadd.f32 %v38, %v225
  %v280 = vadd.f32 %v39, %v230
  %v281 = vadd.f32 %v40, %v233
  %v282 = vadd.f32 %v41, %v238
  %v283 = vadd.f32 %v42, %v241
  %v284 = vadd.f32 %v43, %v246
  %v285 = vadd.f32 %v44, %v249
  %v286 = vadd.f32 %v45, %v254
  %v287 = vadd.f32 %v46, %v257
  %v288 = vadd.f32 %v47, %v262
  %v289 = vadd.f32 %v48, %v265
  %v290 = vadd.f32 %v49, %v270
  %v291 = vadd.f32 %v50, %v273
  %292 = vst [vmem:[#allocation2] sm:$0xff] %v276
  %293 = vst [vmem:[#allocation2 + $0x8] sm:$0xff] %v277
  %294 = vst [vmem:[#allocation2 + $0x10] sm:$0xff] %v278
  %295 = vst [vmem:[#allocation2 + $0x18] sm:$0xff] %v279
  %296 = vst [vmem:[#allocation2 + $0x20] sm:$0xff] %v280
  %297 = vst [vmem:[#allocation2 + $0x28] sm:$0xff] %v281
  %298 = vst [vmem:[#allocation2 + $0x30] sm:$0xff] %v282
  %299 = vst [vmem:[#allocation2 + $0x38] sm:$0xff] %v283
  %300 = vst [vmem:[#allocation2 + $0x40] sm:$0xff] %v284
  %301 = vst [vmem:[#allocation2 + $0x48] sm:$0xff] %v285
  %302 = vst [vmem:[#allocation2 + $0x50] sm:$0xff] %v286
  %303 = vst [vmem:[#allocation2 + $0x58] sm:$0xff] %v287
  %304 = vst [vmem:[#allocation2 + $0x60] sm:$0xff] %v288
  %305 = vst [vmem:[#allocation2 + $0x68] sm:$0xff] %v289
  %306 = vst [vmem:[#allocation2 + $0x70] sm:$0xff] %v290
  %307 = vst [vmem:[#allocation2 + $0x78] sm:$0xff] %v291
  // Predicated region
  $region18: #{model_forward.11} parent=0 // pred_check
    %p308 = pneg %p15
  $region19: #{model_forward.11} parent=0 // pred_check_branch
    %310 = sbr.rel (%p308) target = $region21
  $region20: #{model_forward.11} parent=0 // pred_region
    %v311 = vld [vmem:[#allocation2] sm:$0xff]
    %v312 = vld [vmem:[#allocation2 + $0x8] sm:$0xff]
    %v313 = vld [vmem:[#allocation2 + $0x10] sm:$0xff]
    %v314 = vld [vmem:[#allocation2 + $0x18] sm:$0xff]
    %v315 = vld [vmem:[#allocation2 + $0x20] sm:$0xff]
    %v316 = vld [vmem:[#allocation2 + $0x28] sm:$0xff]
    %v317 = vld [vmem:[#allocation2 + $0x30] sm:$0xff]
    %v318 = vld [vmem:[#allocation2 + $0x38] sm:$0xff]
    %v319 = vld [vmem:[#allocation2 + $0x40] sm:$0xff]
    %v320 = vld [vmem:[#allocation2 + $0x48] sm:$0xff]
    %v321 = vld [vmem:[#allocation2 + $0x50] sm:$0xff]
    %v322 = vld [vmem:[#allocation2 + $0x58] sm:$0xff]
    %v323 = vld [vmem:[#allocation2 + $0x60] sm:$0xff]
    %v324 = vld [vmem:[#allocation2 + $0x68] sm:$0xff]
    %v325 = vld [vmem:[#allocation2 + $0x70] sm:$0xff]
    %v326 = vld [vmem:[#allocation2 + $0x78] sm:$0xff]
    %v327 = vld [vmem:[%s2] sm:$0x1]
    %v329 = vlaneseq
    %v330 = vshrl.u32 %v329, 7
    %v331 = vsub.s32 0, %v330
    %v332 = vrot.slane %v327, %v331
    %v334 = vadd.f32 %v311, %v332
    %v335 = vadd.f32 %v312, %v332
    %v336 = vadd.f32 %v313, %v332
    %v337 = vadd.f32 %v314, %v332
    %v338 = vadd.f32 %v315, %v332
    %v339 = vadd.f32 %v316, %v332
    %v340 = vadd.f32 %v317, %v332
    %v341 = vadd.f32 %v318, %v332
    %v342 = vadd.f32 %v319, %v332
    %v343 = vadd.f32 %v320, %v332
    %v344 = vadd.f32 %v321, %v332
    %v345 = vadd.f32 %v322, %v332
    %v346 = vadd.f32 %v323, %v332
    %v347 = vadd.f32 %v324, %v332
    %v348 = vadd.f32 %v325, %v332
    %v349 = vadd.f32 %v326, %v332
    %350 = vst [vmem:[%s3] sm:$0xff] %v334
    %351 = vst [vmem:[%s3 + $0x8] sm:$0xff] %v335
    %352 = vst [vmem:[%s3 + $0x10] sm:$0xff] %v336
    %353 = vst [vmem:[%s3 + $0x18] sm:$0xff] %v337
    %354 = vst [vmem:[%s3 + $0x20] sm:$0xff] %v338
    %355 = vst [vmem:[%s3 + $0x28] sm:$0xff] %v339
    %356 = vst [vmem:[%s3 + $0x30] sm:$0xff] %v340
    %357 = vst [vmem:[%s3 + $0x38] sm:$0xff] %v341
    %358 = vst [vmem:[%s3 + $0x40] sm:$0xff] %v342
    %359 = vst [vmem:[%s3 + $0x48] sm:$0xff] %v343
    %360 = vst [vmem:[%s3 + $0x50] sm:$0xff] %v344
    %361 = vst [vmem:[%s3 + $0x58] sm:$0xff] %v345
    %362 = vst [vmem:[%s3 + $0x60] sm:$0xff] %v346
    %363 = vst [vmem:[%s3 + $0x68] sm:$0xff] %v347
    %364 = vst [vmem:[%s3 + $0x70] sm:$0xff] %v348
    %365 = vst [vmem:[%s3 + $0x78] sm:$0xff] %v349
  $region21: #{model_forward.11} parent=0 // pred_fallthru
    _
  // Predicated region
  $region22: #{model_forward.11} parent=0 // pred_check
    _
  $region23: #{model_forward.11} parent=0 // pred_check_branch
    %367 = sbr.rel (0) target = $region25
  $region24: #{model_forward.11} parent=0 // pred_region
    _
  $region25: #{model_forward.11} parent=0 // pred_fallthru
    _
  // Predicated region
  $region26: #{model_forward.11} parent=0 // pred_check
    _
  $region27: #{model_forward.11} parent=0 // pred_check_branch
    %369 = sbr.rel (0) target = $region29
  $region28: #{model_forward.11} parent=0 // pred_region
    _
  $region29: #{model_forward.11} parent=0 // pred_fallthru
    _

</llo_original>
